<compile_context>
chip_gen: v5e
topology: v5e:2x2
jax: 0.10.0
libtpu: 0.0.40
codegen_flags: <defaults>
</compile_context>

<pallas_src>
import functools

import numpy as np
import jax
import jax.numpy as jnp
from jax.experimental import pallas as pl
from jax.experimental.pallas import tpu as pltpu


def _contract_kernel(x_ref, p_ref, o_ref, *, gain, precision):
    # x_ref: (row_tile, s, s*Wt)   input rows for this (n, row, w) tile, all s_h bands
    # p_ref: (s, s*Wt, Wt)         one-hot column-selection matrices (VMEM-resident)
    # o_ref: (s, s, row_tile, Wt)  all s*s output groups for this tile
    s = gain
    for si in range(s):
        xs = x_ref[:, si, :]                       # (row_tile, s*Wt), loaded once per band
        for sj in range(s):
            o_ref[si, sj] = jnp.dot(
                xs, p_ref[sj],
                preferred_element_type=jnp.float32,
                precision=precision,
            ).astype(o_ref.dtype)


def _selection_matrices(gain, w_tile, dtype):
    """P[sj, k, w'] = 1 iff k == w'*gain + sj  (block-diagonal one-hot gather)."""
    s = gain
    k = np.arange(s * w_tile).reshape(1, s * w_tile, 1)
    wp = np.arange(w_tile).reshape(1, 1, w_tile)
    sj = np.arange(s).reshape(s, 1, 1)
    P = (k == wp * s + sj).astype(np.float32)
    return jnp.asarray(P, dtype=dtype)


def _round_up(x, m):
    return ((x + m - 1) // m) * m


def _pick_w_tile(Wc):
    # 128 keeps the contraction length (s*Wt MACs/element) minimal while staying
    # lane-dense for the output stores; fall back to the full extent otherwise.
    return 128 if Wc % 128 == 0 else Wc


def _pick_row_tile(rows, gain, w_tile, itemsize, budget_bytes=12 * 2**20):
    """Largest 8-aligned row tile whose double-buffered (padded) VMEM fits the budget."""
    if rows <= 8:
        return rows
    s = gain
    lane_in = _round_up(s * w_tile, 128)
    lane_out = _round_up(w_tile, 128)
    sub_in = _round_up(s, 8)                      # sublane padding of the (s, s*Wt) tile
    per_row = 2 * (sub_in * lane_in + s * s * lane_out) * itemsize
    p_bytes = 2 * s * _round_up(s * w_tile, 8) * lane_out * itemsize
    cap = (budget_bytes - p_bytes) // per_row
    cap = max(8, (cap // 8) * 8)
    cap = min(cap, 1024)
    return min(cap, (rows // 8) * 8)


def contract(x, gain=2, row_tile=None, w_tile=None):
    N, C, H, W = x.shape
    s = gain
    assert H % s == 0 and W % s == 0, "H and W must be divisible by gain"
    Hc, Wc = H // s, W // s

    if not jnp.issubdtype(x.dtype, jnp.floating):
        # TODO(synk): integer dtypes can't ride the MXU one-hot gather (v7x MXU has
        # no integer mode); fall back to the pure-JAX layout op for them.
        return contract_ref(x, gain=gain)

    rows = C * Hc
    if w_tile is None:
        w_tile = _pick_w_tile(Wc)
    assert Wc % w_tile == 0, "w_tile must divide W // gain"
    WT = Wc // w_tile

    if row_tile is None:
        row_tile = _pick_row_tile(rows, s, w_tile, x.dtype.itemsize)
        # Keep >=2 blocks on the parallel axes so both v7x TensorCores get work.
        if N == 1 and WT == 1 and rows >= 16 and row_tile >= rows:
            row_tile = max(8, ((row_tile // 2) // 8) * 8)
    RT = pl.cdiv(rows, row_tile)

    # Free, contiguous reshape: x2[n, c*Hc + h', si, w] == x[n, c, h'*s + si, w]
    x2 = x.reshape(N, rows, s, W)

    # Tiny one-hot selection matrices, fetched once (constant index_map) and
    # resident in VMEM for the whole grid.
    P = _selection_matrices(s, w_tile, x.dtype)

    # One-hot gather is exact: f32 needs HIGHEST (multi-pass) to keep the full
    # mantissa; bf16 is already exact at DEFAULT with f32 accumulation.
    precision = (jax.lax.Precision.DEFAULT if x.dtype == jnp.bfloat16
                 else jax.lax.Precision.HIGHEST)

    kernel = functools.partial(_contract_kernel, gain=s, precision=precision)

    y = pl.pallas_call(
        kernel,
        out_shape=jax.ShapeDtypeStruct((N, s, s, rows, Wc), x.dtype),
        grid=(N, RT, WT),
        in_specs=[
            # Input slab: all s row-bands (si) for one row tile and one W tile.
            pl.BlockSpec((None, row_tile, s, s * w_tile),
                         lambda n, r, w: (n, r, 0, w)),
            # Selection constant: constant block index -> DMA'd once, stays resident.
            pl.BlockSpec((s, s * w_tile, w_tile),
                         lambda n, r, w: (0, 0, 0)),
        ],
        out_specs=pl.BlockSpec((None, s, s, row_tile, w_tile),
                               lambda n, r, w: (n, 0, 0, r, w)),
        compiler_params=pltpu.CompilerParams(
            dimension_semantics=("parallel", "parallel", "parallel")),
    )(x2, P)

    # y[n, si, sj, c*Hc + h', w'] == out[n, (si*s + sj)*C + c, h', w']  -> free reshape.
    return y.reshape(N, C * s * s, Hc, Wc)


# ---------------------------------------------------------------------------
# Pure-JAX reference (mirrors the PyTorch forward exactly)
# ---------------------------------------------------------------------------
def contract_ref(x, gain=2):
    N, C, H, W = x.shape
    s = gain
    y = x.reshape(N, C, H // s, s, W // s, s)
    y = y.transpose(0, 3, 5, 1, 2, 4)
    return y.reshape(N, C * s * s, H // s, W // s)


if __name__ == "__main__":
    N, C, H, W = 2, 4, 16, 16
    GAIN = 2

    key = jax.random.PRNGKey(0)
    x = jax.random.normal(key, (N, C, H, W), jnp.float32)

    out = jax.block_until_ready(contract(x, gain=GAIN))
    assert out.shape == (N, C * GAIN * GAIN, H // GAIN, W // GAIN)

    ref = contract_ref(x, gain=GAIN)
    # One-hot gather at HIGHEST precision is exact for f32; keep the tolerance
    # tight so an accidental precision downgrade would be caught.
    if not np.allclose(np.asarray(out), np.asarray(ref), atol=1e-6, rtol=1e-6):
        raise AssertionError("Pallas Contract result mismatch vs reference")

    print("KERNEL_OK")
</pallas_src>

<mosaic_0001>
module attributes {stable_mosaic.version = 11 : i64} {
  func.func @_contract_kernel(%arg0: i32, %arg1: i32, %arg2: i32, %arg3: memref<1x32x2x16xf32, #tpu.memory_space<vmem>>, %arg4: memref<2x16x8xf32, #tpu.memory_space<vmem>>, %arg5: memref<1x2x2x32x8xf32, #tpu.memory_space<vmem>>) attributes {dimension_semantics = [#tpu.dimension_semantics<parallel>, #tpu.dimension_semantics<parallel>, #tpu.dimension_semantics<parallel>], iteration_bounds = array<i64: 2, 1, 1>, scalar_prefetch = 0 : i64, scratch_operands = 0 : i64, tpu.core_type = #tpu.core_type<tc>, window_params = [{transform_indices = @transform_0, window_bounds = array<i64: 1, 32, 2, 16>}, {pipeline_mode = #tpu.pipeline_mode<synchronous>, transform_indices = @transform_1, window_bounds = array<i64: 2, 16, 8>}, {transform_indices = @transform_2, window_bounds = array<i64: 1, 2, 2, 32, 8>}]} {
    %c0 = arith.constant 0 : index
    %c0_0 = arith.constant 0 : index
    %c0_1 = arith.constant 0 : index
    %c0_2 = arith.constant 0 : index
    %0 = vector.load %arg3[%c0, %c0_0, %c0_1, %c0_2] : memref<1x32x2x16xf32, #tpu.memory_space<vmem>>, vector<1x32x1x16xf32>
    %1 = vector.shape_cast %0 : vector<1x32x1x16xf32> to vector<32x16xf32>
    %c0_3 = arith.constant 0 : index
    %c0_4 = arith.constant 0 : index
    %c0_5 = arith.constant 0 : index
    %2 = vector.load %arg4[%c0_3, %c0_4, %c0_5] : memref<2x16x8xf32, #tpu.memory_space<vmem>>, vector<1x16x8xf32>
    %3 = vector.shape_cast %2 : vector<1x16x8xf32> to vector<16x8xf32>
    %cst = arith.constant dense<0.000000e+00> : vector<32x8xf32>
    %4 = tpu.matmul %1, %3, %cst {dimension_numbers = #tpu.dot_dimension_numbers<[1], [0], [0], [1], [0, 0, 1, 1], [], []>, precision = #tpu.contract_precision<fp32>} : vector<32x16xf32>, vector<16x8xf32>, vector<32x8xf32> -> vector<32x8xf32>
    %c0_6 = arith.constant 0 : index
    %c0_7 = arith.constant 0 : index
    %c0_8 = arith.constant 0 : index
    %c0_9 = arith.constant 0 : index
    %c0_10 = arith.constant 0 : index
    %5 = vector.load %arg5[%c0_6, %c0_7, %c0_8, %c0_9, %c0_10] : memref<1x2x2x32x8xf32, #tpu.memory_space<vmem>>, vector<1x1x1x32x8xf32>
    %6 = vector.shape_cast %5 : vector<1x1x1x32x8xf32> to vector<32x8xf32>
    %7 = vector.shape_cast %4 : vector<32x8xf32> to vector<1x1x1x32x8xf32>
    tpu.vector_store %arg5[%c0_6, %c0_7, %c0_8, %c0_9, %c0_10], %7 {strides = array<i32>} : memref<1x2x2x32x8xf32, #tpu.memory_space<vmem>>, vector<1x1x1x32x8xf32>,
    %c1 = arith.constant 1 : index
    %c0_11 = arith.constant 0 : index
    %c0_12 = arith.constant 0 : index
    %8 = vector.load %arg4[%c1, %c0_11, %c0_12] : memref<2x16x8xf32, #tpu.memory_space<vmem>>, vector<1x16x8xf32>
    %9 = vector.shape_cast %8 : vector<1x16x8xf32> to vector<16x8xf32>
    %cst_13 = arith.constant dense<0.000000e+00> : vector<32x8xf32>
    %10 = tpu.matmul %1, %9, %cst_13 {dimension_numbers = #tpu.dot_dimension_numbers<[1], [0], [0], [1], [0, 0, 1, 1], [], []>, precision = #tpu.contract_precision<fp32>} : vector<32x16xf32>, vector<16x8xf32>, vector<32x8xf32> -> vector<32x8xf32>
    %c0_14 = arith.constant 0 : index
    %c0_15 = arith.constant 0 : index
    %c1_16 = arith.constant 1 : index
    %c0_17 = arith.constant 0 : index
    %c0_18 = arith.constant 0 : index
    %11 = vector.load %arg5[%c0_14, %c0_15, %c1_16, %c0_17, %c0_18] : memref<1x2x2x32x8xf32, #tpu.memory_space<vmem>>, vector<1x1x1x32x8xf32>
    %12 = vector.shape_cast %11 : vector<1x1x1x32x8xf32> to vector<32x8xf32>
    %13 = vector.shape_cast %10 : vector<32x8xf32> to vector<1x1x1x32x8xf32>
    tpu.vector_store %arg5[%c0_14, %c0_15, %c1_16, %c0_17, %c0_18], %13 {strides = array<i32>} : memref<1x2x2x32x8xf32, #tpu.memory_space<vmem>>, vector<1x1x1x32x8xf32>,
    %c0_19 = arith.constant 0 : index
    %c0_20 = arith.constant 0 : index
    %c1_21 = arith.constant 1 : index
    %c0_22 = arith.constant 0 : index
    %14 = vector.load %arg3[%c0_19, %c0_20, %c1_21, %c0_22] : memref<1x32x2x16xf32, #tpu.memory_space<vmem>>, vector<1x32x1x16xf32>
    %15 = vector.shape_cast %14 : vector<1x32x1x16xf32> to vector<32x16xf32>
    %c0_23 = arith.constant 0 : index
    %c0_24 = arith.constant 0 : index
    %c0_25 = arith.constant 0 : index
    %16 = vector.load %arg4[%c0_23, %c0_24, %c0_25] : memref<2x16x8xf32, #tpu.memory_space<vmem>>, vector<1x16x8xf32>
    %17 = vector.shape_cast %16 : vector<1x16x8xf32> to vector<16x8xf32>
    %cst_26 = arith.constant dense<0.000000e+00> : vector<32x8xf32>
    %18 = tpu.matmul %15, %17, %cst_26 {dimension_numbers = #tpu.dot_dimension_numbers<[1], [0], [0], [1], [0, 0, 1, 1], [], []>, precision = #tpu.contract_precision<fp32>} : vector<32x16xf32>, vector<16x8xf32>, vector<32x8xf32> -> vector<32x8xf32>
    %c0_27 = arith.constant 0 : index
    %c1_28 = arith.constant 1 : index
    %c0_29 = arith.constant 0 : index
    %c0_30 = arith.constant 0 : index
    %c0_31 = arith.constant 0 : index
    %19 = vector.load %arg5[%c0_27, %c1_28, %c0_29, %c0_30, %c0_31] : memref<1x2x2x32x8xf32, #tpu.memory_space<vmem>>, vector<1x1x1x32x8xf32>
    %20 = vector.shape_cast %19 : vector<1x1x1x32x8xf32> to vector<32x8xf32>
    %21 = vector.shape_cast %18 : vector<32x8xf32> to vector<1x1x1x32x8xf32>
    tpu.vector_store %arg5[%c0_27, %c1_28, %c0_29, %c0_30, %c0_31], %21 {strides = array<i32>} : memref<1x2x2x32x8xf32, #tpu.memory_space<vmem>>, vector<1x1x1x32x8xf32>,
    %c1_32 = arith.constant 1 : index
    %c0_33 = arith.constant 0 : index
    %c0_34 = arith.constant 0 : index
    %22 = vector.load %arg4[%c1_32, %c0_33, %c0_34] : memref<2x16x8xf32, #tpu.memory_space<vmem>>, vector<1x16x8xf32>
    %23 = vector.shape_cast %22 : vector<1x16x8xf32> to vector<16x8xf32>
    %cst_35 = arith.constant dense<0.000000e+00> : vector<32x8xf32>
    %24 = tpu.matmul %15, %23, %cst_35 {dimension_numbers = #tpu.dot_dimension_numbers<[1], [0], [0], [1], [0, 0, 1, 1], [], []>, precision = #tpu.contract_precision<fp32>} : vector<32x16xf32>, vector<16x8xf32>, vector<32x8xf32> -> vector<32x8xf32>
    %c0_36 = arith.constant 0 : index
    %c1_37 = arith.constant 1 : index
    %c1_38 = arith.constant 1 : index
    %c0_39 = arith.constant 0 : index
    %c0_40 = arith.constant 0 : index
    %25 = vector.load %arg5[%c0_36, %c1_37, %c1_38, %c0_39, %c0_40] : memref<1x2x2x32x8xf32, #tpu.memory_space<vmem>>, vector<1x1x1x32x8xf32>
    %26 = vector.shape_cast %25 : vector<1x1x1x32x8xf32> to vector<32x8xf32>
    %27 = vector.shape_cast %24 : vector<32x8xf32> to vector<1x1x1x32x8xf32>
    tpu.vector_store %arg5[%c0_36, %c1_37, %c1_38, %c0_39, %c0_40], %27 {strides = array<i32>} : memref<1x2x2x32x8xf32, #tpu.memory_space<vmem>>, vector<1x1x1x32x8xf32>,
    return
  }
  func.func @transform_0(%arg0: i32, %arg1: i32, %arg2: i32) -> (i32, i32, i32, i32) {
    %c0_i32 = arith.constant 0 : i32
    %c0_i32_0 = arith.constant 0 : i32
    return %arg0, %arg1, %c0_i32, %arg2 : i32, i32, i32, i32
  }
  func.func @transform_1(%arg0: i32, %arg1: i32, %arg2: i32) -> (i32, i32, i32) {
    %c0_i32 = arith.constant 0 : i32
    %c0_i32_0 = arith.constant 0 : i32
    %c0_i32_1 = arith.constant 0 : i32
    %c0_i32_2 = arith.constant 0 : i32
    return %c0_i32, %c0_i32_0, %c0_i32_1 : i32, i32, i32
  }
  func.func @transform_2(%arg0: i32, %arg1: i32, %arg2: i32) -> (i32, i32, i32, i32, i32) {
    %c0_i32 = arith.constant 0 : i32
    %c0_i32_0 = arith.constant 0 : i32
    %c0_i32_1 = arith.constant 0 : i32
    return %arg0, %c0_i32, %c0_i32_0, %arg1, %arg2 : i32, i32, i32, i32, i32
  }
}

</mosaic_0001>

<llo_original>
// kernel: tpu_custom_call.1
$region0: #{tpu_custom_call.1}
  #allocation0 [shape = 'u32[]', space=smem, size = 0x4, offset = 0x4, fixed_abs, tag = 'smem constant byte address 0x4 - core index']
  #allocation1 [shape = 'u32[72,128]{1,0:T(1,128)}', space=vmem, size = 0x9000, scoped, tag = 'internal scratch']
  %s0 = inlined_call_operand.vmem [shape: f32[2,32,2,16], index: 0, kind: input, shape index: {}]
  %s1 = inlined_call_operand.vmem [shape: f32[2,16,8], index: 1, kind: input, shape index: {}]
  %s2 = inlined_call_operand.vmem [shape: f32[2,2,2,32,8], index: 2, kind: output, shape index: {}]
  %s3 = sld [smem:[#allocation0]]
  $region41: #{tpu_custom_call.1} parent=0
    _
  %s5 = ssub.s32 1, %s3
  %s6 = scalar_select 0, %s5, %s3
  loop: start=0, step=1, limit=4
  $region2: #{tpu_custom_call.1} parent=0 // loop_pre_header
    _
  $region3: #{tpu_custom_call.1} parent=0 // loop_header
    %s8 = sphi 0, %s12
    %p9 = scmp.ge.s32.totalorder %s8, 4
    %s15 = sphi 0, %s34
    %s16 = sphi 0, %s30
    %s17 = sphi 0, %s26
    %s18 = sphi 0, %s15
    %s19 = sphi 0, %s16
    %s20 = sphi 0, %s17
    %s21 = sphi 0, %s18
    %s22 = sphi 0, %s19
    %s23 = sphi 0, %s20
    %s41 = sphi 0, %s43
    %s44 = sphi 0, %s41
    %s45 = sphi 0, %s44
    %s61 = sphi 0, %s45
    %s65 = sphi 0, %s65
    %s67 = sphi 0, %s65
    %s68 = sphi 0, %s67
    %s82 = sphi 0, %s68
    %s92 = sphi 0, %s94
    %s95 = sphi 0, %s92
    %s96 = sphi 0, %s95
    %s112 = sphi 0, %s96
  $region4: #{tpu_custom_call.1} parent=0 // loop_header_branch
    %11 = sbr.rel (%p9) target = $region8
  $region5: #{tpu_custom_call.1} parent=0 // loop_body
    %s13 = ssub.s32 %s8, 1
    %s14 = ssub.s32 %s8, 2
    %s24 = sadd.s32 1, %s17
    %p25 = scmp.ge.s32.totalorder %s24, 1
    %s26 = scalar_select %p25, 0, %s24
    %s27 = sadd.s32 1, %s16
    %s28 = scalar_select %p25, %s27, %s16
    %p29 = scmp.ge.s32.totalorder %s28, 1
    %s30 = scalar_select %p29, 0, %s28
    %s31 = sadd.s32 1, %s15
    %s32 = scalar_select %p29, %s31, %s15
    %p33 = scmp.ge.s32.totalorder %s32, 2
    %s34 = scalar_select %p33, 0, %s32
    %s35 = ssub.s32 %s15, %s34
    %s36 = ssub.s32 %s16, %s30
    %s37 = sor.u32 %s35, %s36
    %s38 = ssub.s32 %s17, %s26
    %s39 = sor.u32 %s37, %s38
    %p40 = scmp.eq.s32.totalorder %s39, 0
    %s42 = sadd.s32 %s41, 1
    %s43 = scalar_select %p40, %s41, %s42
    %p46 = pneg %p40
    %p47 = scmp.eq.s32.totalorder %s8, 1
    %p48 = por %p46, %p47
    %p49 = scmp.ne.s32.totalorder %s41, %s44
    %p50 = scmp.eq.s32.totalorder %s8, 0
    %p51 = por %p49, %p50
    %p52 = scmp.ne.s32.totalorder %s41, %s44
    %p53 = scmp.eq.s32.totalorder %s13, 1
    %p54 = por %p52, %p53
    %p55 = scmp.ne.s32.totalorder %s44, %s45
    %p56 = scmp.eq.s32.totalorder %s13, 0
    %p57 = por %p55, %p56
    %p58 = scmp.ne.s32.totalorder %s44, %s45
    %p59 = scmp.eq.s32.totalorder %s14, 1
    %p60 = por %p58, %p59
    %p62 = scmp.ne.s32.totalorder %s45, %s61
    %p63 = scmp.eq.s32.totalorder %s14, 0
    %p64 = por %p62, %p63
    %s66 = sadd.s32 %s65, 1
    %p69 = scmp.eq.s32.totalorder %s8, 1
    %p70 = scmp.ne.s32.totalorder %s65, %s67
    %p71 = scmp.eq.s32.totalorder %s8, 0
    %p72 = por %p70, %p71
    %p73 = scmp.ne.s32.totalorder %s65, %s67
    %p74 = scmp.eq.s32.totalorder %s13, 1
    %p75 = por %p73, %p74
    %p76 = scmp.ne.s32.totalorder %s67, %s68
    %p77 = scmp.eq.s32.totalorder %s13, 0
    %p78 = por %p76, %p77
    %p79 = scmp.ne.s32.totalorder %s67, %s68
    %p80 = scmp.eq.s32.totalorder %s14, 1
    %p81 = por %p79, %p80
    %p83 = scmp.ne.s32.totalorder %s68, %s82
    %p84 = scmp.eq.s32.totalorder %s14, 0
    %p85 = por %p83, %p84
    %s86 = ssub.s32 %s15, %s34
    %s87 = ssub.s32 %s16, %s30
    %s88 = sor.u32 %s86, %s87
    %s89 = ssub.s32 %s17, %s26
    %s90 = sor.u32 %s88, %s89
    %p91 = scmp.eq.s32.totalorder %s90, 0
    %s93 = sadd.s32 %s92, 1
    %s94 = scalar_select %p91, %s92, %s93
    %p97 = pneg %p91
    %p98 = scmp.eq.s32.totalorder %s8, 1
    %p99 = por %p97, %p98
    %p100 = scmp.ne.s32.totalorder %s92, %s95
    %p101 = scmp.eq.s32.totalorder %s8, 0
    %p102 = por %p100, %p101
    %p103 = scmp.ne.s32.totalorder %s92, %s95
    %p104 = scmp.eq.s32.totalorder %s13, 1
    %p105 = por %p103, %p104
    %p106 = scmp.ne.s32.totalorder %s95, %s96
    %p107 = scmp.eq.s32.totalorder %s13, 0
    %p108 = por %p106, %p107
    %p109 = scmp.ne.s32.totalorder %s95, %s96
    %p110 = scmp.eq.s32.totalorder %s14, 1
    %p111 = por %p109, %p110
    %p113 = scmp.ne.s32.totalorder %s96, %s112
    %p114 = scmp.eq.s32.totalorder %s14, 0
    %p115 = por %p113, %p114
    %p116 = scmp.le.s32.totalorder 1, %s8
    %p117 = scmp.lt.s32.totalorder %s8, 3
    %p118 = pnand %p116, %p117
    %p119 = pneg %p118
    // Predicated region
    $region9: #{tpu_custom_call.1} parent=5 // pred_check
      _
    $region10: #{tpu_custom_call.1} parent=5 // pred_check_branch
      %121 = sbr.rel (%p118) target = $region12
    $region11: #{tpu_custom_call.1} parent=5 // pred_region
      %s122 = ssub.s32 %s8, 1
      // Predicated region
      $region13: #{tpu_custom_call.1} parent=11 // pred_check
        %p123 = pneg %p78
      $region14: #{tpu_custom_call.1} parent=11 // pred_check_branch
        %125 = sbr.rel (%p123) target = $region16
      $region15: #{tpu_custom_call.1} parent=11 // pred_region
        _
      $region16: #{tpu_custom_call.1} parent=11 // pred_fallthru
        _
    $region12: #{tpu_custom_call.1} parent=5 // pred_fallthru
      _
    %p126 = scmp.lt.s32.totalorder %s8, 2
    // Predicated region
    $region17: #{tpu_custom_call.1} parent=5 // pred_check
      %p127 = pneg %p126
    $region18: #{tpu_custom_call.1} parent=5 // pred_check_branch
      %129 = sbr.rel (%p127) target = $region20
    $region19: #{tpu_custom_call.1} parent=5 // pred_region
      // Predicated region
      $region21: #{tpu_custom_call.1} parent=19 // pred_check
        %p130 = pneg %p51
      $region22: #{tpu_custom_call.1} parent=19 // pred_check_branch
        %132 = sbr.rel (%p130) target = $region24
      $region23: #{tpu_custom_call.1} parent=19 // pred_region
        %s133 = smul.u32 32, %s16
        %p134 = scmp.lt.s32.totalorder %s15, 1
        %s135 = scalar_select %p134, %s15, 1
        %p136 = scmp.lt.s32.totalorder %s133, 31
        %s137 = scalar_select %p136, %s133, 31
        %p138 = scmp.lt.s32.totalorder %s17, 0
        %s139 = scalar_select %p138, %s17, 0
        %s140 = sadd.s32 %s139, %s137
        %s141 = smul.addr %s135, 32
        %s142 = sadd.s32 %s140, %s141
        %s143 = smul.addr %s142, 2
        %s144 = scalar_lea.vmem %s0, %s143
        %s145 = smul.u32 32, %s16
      $region24: #{tpu_custom_call.1} parent=19 // pred_fallthru
        _
    $region20: #{tpu_custom_call.1} parent=5 // pred_fallthru
      _
    %p146 = scmp.le.s32.totalorder 1, %s8
    %p147 = scmp.lt.s32.totalorder %s8, 3
    %p148 = pnand %p146, %p147
    %p149 = pneg %p148
    // Predicated region
    $region25: #{tpu_custom_call.1} parent=5 // pred_check
      _
    $region26: #{tpu_custom_call.1} parent=5 // pred_check_branch
      %151 = sbr.rel (%p148) target = $region28
    $region27: #{tpu_custom_call.1} parent=5 // pred_region
      %s152 = ssub.s32 %s8, 1
      %s153 = smul.u32 32, %s19
      %p154 = scmp.lt.s32.totalorder %s18, 1
      %s155 = scalar_select %p154, %s18, 1
      %p156 = scmp.lt.s32.totalorder %s153, 31
      %s157 = scalar_select %p156, %s153, 31
      %p158 = scmp.lt.s32.totalorder %s20, 0
      %s159 = scalar_select %p158, %s20, 0
      %s160 = sadd.s32 %s159, %s157
      %s161 = smul.addr %s155, 32
      %s162 = sadd.s32 %s160, %s161
      %s163 = smul.addr %s162, 2
      %s164 = scalar_lea.vmem %s0, %s163
      %p165 = pneg %p57
      %p166 = pneg %p54
      %p167 = pneg %p78
      %p168 = pneg %p75
      %p169 = pneg %p108
      %p170 = pneg %p105
      %s171 = smul.u32 4, %s19
      %p172 = scmp.lt.s32.totalorder %s18, 1
      %s173 = scalar_select %p172, %s18, 1
      %p174 = scmp.lt.s32.totalorder %s171, 3
      %s175 = scalar_select %p174, %s171, 3
      %p176 = scmp.lt.s32.totalorder %s20, 0
      %s177 = scalar_select %p176, %s20, 0
      %s178 = sadd.s32 %s177, %s175
      %s179 = smul.addr %s173, 16
      %s180 = sadd.s32 %s178, %s179
      %s181 = smul.addr %s180, 8
      %s182 = scalar_lea.vmem %s2, %s181
      %s183 = smul.u32 32, %s19
      %p184 = scmp.lt.s32.totalorder %s18, 1
      %s185 = scalar_select %p184, %s18, 1
      %p186 = scmp.lt.s32.totalorder %s183, 31
      %s187 = scalar_select %p186, %s183, 31
      %p188 = scmp.lt.s32.totalorder %s20, 0
      %s189 = scalar_select %p188, %s20, 0
      %s190 = sadd.s32 %s189, %s187
      %s191 = smul.addr %s185, 32
      %s192 = sadd.s32 %s190, %s191
      %s193 = smul.addr %s192, 2
      %s194 = scalar_lea.vmem %s0, %s193
      %s195 = smul.u32 32, %s19
      %s196 = smul.u32 4, %s19
      %p197 = scmp.lt.s32.totalorder %s18, 1
      %s198 = scalar_select %p197, %s18, 1
      %p199 = scmp.lt.s32.totalorder %s196, 3
      %s200 = scalar_select %p199, %s196, 3
      %p201 = scmp.lt.s32.totalorder %s20, 0
      %s202 = scalar_select %p201, %s20, 0
      %s203 = sadd.s32 %s202, %s200
      %s204 = smul.addr %s198, 16
      %s205 = sadd.s32 %s203, %s204
      %s206 = smul.addr %s205, 8
      %s207 = scalar_lea.vmem %s2, %s206
      %s208 = smul.u32 4, %s19
      %v209 = vld [vmem:[%s194] sm:$0x1]
      %v210 = vld [vmem:[%s194 + $0x2] sm:$0x1]
      %v211 = vld [vmem:[%s194 + $0x4] sm:$0x1]
      %v212 = vld [vmem:[%s194 + $0x6] sm:$0x1]
      %v213 = vld [vmem:[%s194 + $0x8] sm:$0x1]
      %v214 = vld [vmem:[%s194 + $0xa] sm:$0x1]
      %v215 = vld [vmem:[%s194 + $0xc] sm:$0x1]
      %v216 = vld [vmem:[%s194 + $0xe] sm:$0x1]
      %v217 = vld [vmem:[%s194 + $0x10] sm:$0x1]
      %v218 = vld [vmem:[%s194 + $0x12] sm:$0x1]
      %v219 = vld [vmem:[%s194 + $0x14] sm:$0x1]
      %v220 = vld [vmem:[%s194 + $0x16] sm:$0x1]
      %v221 = vld [vmem:[%s194 + $0x18] sm:$0x1]
      %v222 = vld [vmem:[%s194 + $0x1a] sm:$0x1]
      %v223 = vld [vmem:[%s194 + $0x1c] sm:$0x1]
      %v224 = vld [vmem:[%s194 + $0x1e] sm:$0x1]
      %v225 = vld [vmem:[%s194 + $0x20] sm:$0x1]
      %v226 = vld [vmem:[%s194 + $0x22] sm:$0x1]
      %v227 = vld [vmem:[%s194 + $0x24] sm:$0x1]
      %v228 = vld [vmem:[%s194 + $0x26] sm:$0x1]
      %v229 = vld [vmem:[%s194 + $0x28] sm:$0x1]
      %v230 = vld [vmem:[%s194 + $0x2a] sm:$0x1]
      %v231 = vld [vmem:[%s194 + $0x2c] sm:$0x1]
      %v232 = vld [vmem:[%s194 + $0x2e] sm:$0x1]
      %v233 = vld [vmem:[%s194 + $0x30] sm:$0x1]
      %v234 = vld [vmem:[%s194 + $0x32] sm:$0x1]
      %v235 = vld [vmem:[%s194 + $0x34] sm:$0x1]
      %v236 = vld [vmem:[%s194 + $0x36] sm:$0x1]
      %v237 = vld [vmem:[%s194 + $0x38] sm:$0x1]
      %v238 = vld [vmem:[%s194 + $0x3a] sm:$0x1]
      %v239 = vld [vmem:[%s194 + $0x3c] sm:$0x1]
      %v240 = vld [vmem:[%s194 + $0x3e] sm:$0x1]
      %v241 = vld [vmem:[%s1] sm:$0xff]
      %v242 = vld [vmem:[%s1 + $0x8] sm:$0xff]
      %v275 = vrot.slane %v210, 7
      %vm276 = vcmask 1041409
      %v277 = vsel %vm276, %v275, %v209
      %v278 = vrot.slane %v211, 6
      %vm279 = vcmask 1042434
      %v280 = vsel %vm279, %v278, %v277
      %v281 = vrot.slane %v212, 5
      %vm282 = vcmask 1043459
      %v283 = vsel %vm282, %v281, %v280
      %v284 = vrot.slane %v213, 4
      %vm285 = vcmask 1044484
      %v286 = vsel %vm285, %v284, %v283
      %v287 = vrot.slane %v214, 3
      %vm288 = vcmask 1045509
      %v289 = vsel %vm288, %v287, %v286
      %v290 = vrot.slane %v215, 2
      %vm291 = vcmask 1046534
      %v292 = vsel %vm291, %v290, %v289
      %v293 = vrot.slane %v216, 1
      %vm294 = vcmask 1047559
      %v295 = vsel %vm294, %v293, %v292
      %v296 = vrot.slane %v218, 7
      %v297 = vsel %vm276, %v296, %v217
      %v298 = vrot.slane %v219, 6
      %v299 = vsel %vm279, %v298, %v297
      %v300 = vrot.slane %v220, 5
      %v301 = vsel %vm282, %v300, %v299
      %v302 = vrot.slane %v221, 4
      %v303 = vsel %vm285, %v302, %v301
      %v304 = vrot.slane %v222, 3
      %v305 = vsel %vm288, %v304, %v303
      %v306 = vrot.slane %v223, 2
      %v307 = vsel %vm291, %v306, %v305
      %v308 = vrot.slane %v224, 1
      %v309 = vsel %vm294, %v308, %v307
      %v310 = vrot.slane %v226, 7
      %v311 = vsel %vm276, %v310, %v225
      %v312 = vrot.slane %v227, 6
      %v313 = vsel %vm279, %v312, %v311
      %v314 = vrot.slane %v228, 5
      %v315 = vsel %vm282, %v314, %v313
      %v316 = vrot.slane %v229, 4
      %v317 = vsel %vm285, %v316, %v315
      %v318 = vrot.slane %v230, 3
      %v319 = vsel %vm288, %v318, %v317
      %v320 = vrot.slane %v231, 2
      %v321 = vsel %vm291, %v320, %v319
      %v322 = vrot.slane %v232, 1
      %v323 = vsel %vm294, %v322, %v321
      %v324 = vrot.slane %v234, 7
      %v325 = vsel %vm276, %v324, %v233
      %v326 = vrot.slane %v235, 6
      %v327 = vsel %vm279, %v326, %v325
      %v328 = vrot.slane %v236, 5
      %v329 = vsel %vm282, %v328, %v327
      %v330 = vrot.slane %v237, 4
      %v331 = vsel %vm285, %v330, %v329
      %v332 = vrot.slane %v238, 3
      %v333 = vsel %vm288, %v332, %v331
      %v334 = vrot.slane %v239, 2
      %v335 = vsel %vm291, %v334, %v333
      %v336 = vrot.slane %v240, 1
      %v337 = vsel %vm294, %v336, %v335
      %vm338 = vcmask 130048
      %v339 = vsel %vm338, %v295, 0
      %v341 = vsel %vm338, %v309, 0
      %v343 = vsel %vm338, %v323, 0
      %v345 = vsel %vm338, %v337, 0
      %347 = vmatpush.msra.mxu0 0.0
      %348 = vmatpush.msra.mxu0 0.0
      %349 = vmatpush.msra.mxu0 0.0
      %350 = vmatpush.msra.mxu0 0.0
      %351 = vmatpush.msra.mxu0 0.0
      %352 = vmatpush.msra.mxu0 0.0
      %353 = vmatpush.msra.mxu0 0.0
      %354 = vmatpush.msra.mxu0 0.0
      %355 = vmatpush.msra.mxu0 0.0
      %356 = vmatpush.msra.mxu0 0.0
      %357 = vmatpush.msra.mxu0 0.0
      %358 = vmatpush.msra.mxu0 0.0
      %359 = vmatpush.msra.mxu0 0.0
      %360 = vmatpush.msra.mxu0 0.0
      %v361 = vand.u32 %v242, 4294901760
      %362 = vmatpush.msra.mxu0 %v361
      %v363 = vand.u32 %v241, 4294901760
      %364 = vmatpush.msra.mxu0 %v363
      %v365 = vand.u32 %v339, 4294901760
      %v366 = vsub.f32 %v339, %v365
      %v367 = vand.u32 %v366, 4294901760
      %v368 = vsub.f32 %v366, %v367
      %v369 = vand.u32 %v368, 4294901760
      %370 = vmatmul.f32.gmra.mxu0 %v369
      %v371 = vpop.f32.mrf.mxu0
      %v372 = vadd.f32 0.0, %v371
      %v373 = vand.u32 %v341, 4294901760
      %v374 = vsub.f32 %v341, %v373
      %v375 = vand.u32 %v374, 4294901760
      %v376 = vsub.f32 %v374, %v375
      %v377 = vand.u32 %v376, 4294901760
      %378 = vmatmul.f32.gmra.mxu0 %v377
      %v379 = vpop.f32.mrf.mxu0
      %v380 = vadd.f32 0.0, %v379
      %v381 = vand.u32 %v343, 4294901760
      %v382 = vsub.f32 %v343, %v381
      %v383 = vand.u32 %v382, 4294901760
      %v384 = vsub.f32 %v382, %v383
      %v385 = vand.u32 %v384, 4294901760
      %386 = vmatmul.f32.gmra.mxu0 %v385
      %v387 = vpop.f32.mrf.mxu0
      %v388 = vadd.f32 0.0, %v387
      %v389 = vand.u32 %v345, 4294901760
      %v390 = vsub.f32 %v345, %v389
      %v391 = vand.u32 %v390, 4294901760
      %v392 = vsub.f32 %v390, %v391
      %v393 = vand.u32 %v392, 4294901760
      %394 = vmatmul.f32.gmra.mxu0 %v393
      %v395 = vpop.f32.mrf.mxu0
      %v396 = vadd.f32 0.0, %v395
      %397 = vdwg.mxu0
      %398 = vmatpush.msra.mxu0 0.0
      %399 = vmatpush.msra.mxu0 0.0
      %400 = vmatpush.msra.mxu0 0.0
      %401 = vmatpush.msra.mxu0 0.0
      %402 = vmatpush.msra.mxu0 0.0
      %403 = vmatpush.msra.mxu0 0.0
      %404 = vmatpush.msra.mxu0 0.0
      %405 = vmatpush.msra.mxu0 0.0
      %406 = vmatpush.msra.mxu0 0.0
      %407 = vmatpush.msra.mxu0 0.0
      %408 = vmatpush.msra.mxu0 0.0
      %409 = vmatpush.msra.mxu0 0.0
      %410 = vmatpush.msra.mxu0 0.0
      %411 = vmatpush.msra.mxu0 0.0
      %v412 = vand.u32 %v242, 4294901760
      %v413 = vsub.f32 %v242, %v412
      %v414 = vand.u32 %v413, 4294901760
      %v415 = vsub.f32 %v413, %v414
      %v416 = vand.u32 %v415, 4294901760
      %417 = vmatpush.msra.mxu0 %v416
      %v418 = vand.u32 %v241, 4294901760
      %v419 = vsub.f32 %v241, %v418
      %v420 = vand.u32 %v419, 4294901760
      %v421 = vsub.f32 %v419, %v420
      %v422 = vand.u32 %v421, 4294901760
      %423 = vmatpush.msra.mxu0 %v422
      %v424 = vand.u32 %v339, 4294901760
      %425 = vmatmul.f32.gmra.mxu0 %v424
      %v426 = vpop.f32.mrf.mxu0
      %v427 = vadd.f32 %v372, %v426
      %v428 = vand.u32 %v341, 4294901760
      %429 = vmatmul.f32.gmra.mxu0 %v428
      %v430 = vpop.f32.mrf.mxu0
      %v431 = vadd.f32 %v380, %v430
      %v432 = vand.u32 %v343, 4294901760
      %433 = vmatmul.f32.gmra.mxu0 %v432
      %v434 = vpop.f32.mrf.mxu0
      %v435 = vadd.f32 %v388, %v434
      %v436 = vand.u32 %v345, 4294901760
      %437 = vmatmul.f32.gmra.mxu0 %v436
      %v438 = vpop.f32.mrf.mxu0
      %v439 = vadd.f32 %v396, %v438
      %440 = vdwg.mxu0
      %441 = vmatpush.msra.mxu0 0.0
      %442 = vmatpush.msra.mxu0 0.0
      %443 = vmatpush.msra.mxu0 0.0
      %444 = vmatpush.msra.mxu0 0.0
      %445 = vmatpush.msra.mxu0 0.0
      %446 = vmatpush.msra.mxu0 0.0
      %447 = vmatpush.msra.mxu0 0.0
      %448 = vmatpush.msra.mxu0 0.0
      %449 = vmatpush.msra.mxu0 0.0
      %450 = vmatpush.msra.mxu0 0.0
      %451 = vmatpush.msra.mxu0 0.0
      %452 = vmatpush.msra.mxu0 0.0
      %453 = vmatpush.msra.mxu0 0.0
      %454 = vmatpush.msra.mxu0 0.0
      %v455 = vand.u32 %v242, 4294901760
      %v456 = vsub.f32 %v242, %v455
      %457 = vmatpush.msra.mxu0 %v456
      %v458 = vand.u32 %v241, 4294901760
      %v459 = vsub.f32 %v241, %v458
      %460 = vmatpush.msra.mxu0 %v459
      %v461 = vand.u32 %v339, 4294901760
      %v462 = vsub.f32 %v339, %v461
      %463 = vmatmul.f32.gmra.mxu0 %v462
      %v464 = vpop.f32.mrf.mxu0
      %v465 = vadd.f32 %v427, %v464
      %v466 = vand.u32 %v341, 4294901760
      %v467 = vsub.f32 %v341, %v466
      %468 = vmatmul.f32.gmra.mxu0 %v467
      %v469 = vpop.f32.mrf.mxu0
      %v470 = vadd.f32 %v431, %v469
      %v471 = vand.u32 %v343, 4294901760
      %v472 = vsub.f32 %v343, %v471
      %473 = vmatmul.f32.gmra.mxu0 %v472
      %v474 = vpop.f32.mrf.mxu0
      %v475 = vadd.f32 %v435, %v474
      %v476 = vand.u32 %v345, 4294901760
      %v477 = vsub.f32 %v345, %v476
      %478 = vmatmul.f32.gmra.mxu0 %v477
      %v479 = vpop.f32.mrf.mxu0
      %v480 = vadd.f32 %v439, %v479
      %481 = vdwg.mxu0
      %482 = vmatpush.msra.mxu0 0.0
      %483 = vmatpush.msra.mxu0 0.0
      %484 = vmatpush.msra.mxu0 0.0
      %485 = vmatpush.msra.mxu0 0.0
      %486 = vmatpush.msra.mxu0 0.0
      %487 = vmatpush.msra.mxu0 0.0
      %488 = vmatpush.msra.mxu0 0.0
      %489 = vmatpush.msra.mxu0 0.0
      %490 = vmatpush.msra.mxu0 0.0
      %491 = vmatpush.msra.mxu0 0.0
      %492 = vmatpush.msra.mxu0 0.0
      %493 = vmatpush.msra.mxu0 0.0
      %494 = vmatpush.msra.mxu0 0.0
      %495 = vmatpush.msra.mxu0 0.0
      %v496 = vand.u32 %v242, 4294901760
      %497 = vmatpush.msra.mxu0 %v496
      %v498 = vand.u32 %v241, 4294901760
      %499 = vmatpush.msra.mxu0 %v498
      %v500 = vand.u32 %v339, 4294901760
      %v501 = vsub.f32 %v339, %v500
      %v502 = vand.u32 %v501, 4294901760
      %503 = vmatmul.f32.gmra.mxu0 %v502
      %v504 = vpop.f32.mrf.mxu0
      %v505 = vadd.f32 %v465, %v504
      %v506 = vand.u32 %v341, 4294901760
      %v507 = vsub.f32 %v341, %v506
      %v508 = vand.u32 %v507, 4294901760
      %509 = vmatmul.f32.gmra.mxu0 %v508
      %v510 = vpop.f32.mrf.mxu0
      %v511 = vadd.f32 %v470, %v510
      %v512 = vand.u32 %v343, 4294901760
      %v513 = vsub.f32 %v343, %v512
      %v514 = vand.u32 %v513, 4294901760
      %515 = vmatmul.f32.gmra.mxu0 %v514
      %v516 = vpop.f32.mrf.mxu0
      %v517 = vadd.f32 %v475, %v516
      %v518 = vand.u32 %v345, 4294901760
      %v519 = vsub.f32 %v345, %v518
      %v520 = vand.u32 %v519, 4294901760
      %521 = vmatmul.f32.gmra.mxu0 %v520
      %v522 = vpop.f32.mrf.mxu0
      %v523 = vadd.f32 %v480, %v522
      %524 = vdwg.mxu0
      %525 = vmatpush.msra.mxu0 0.0
      %526 = vmatpush.msra.mxu0 0.0
      %527 = vmatpush.msra.mxu0 0.0
      %528 = vmatpush.msra.mxu0 0.0
      %529 = vmatpush.msra.mxu0 0.0
      %530 = vmatpush.msra.mxu0 0.0
      %531 = vmatpush.msra.mxu0 0.0
      %532 = vmatpush.msra.mxu0 0.0
      %533 = vmatpush.msra.mxu0 0.0
      %534 = vmatpush.msra.mxu0 0.0
      %535 = vmatpush.msra.mxu0 0.0
      %536 = vmatpush.msra.mxu0 0.0
      %537 = vmatpush.msra.mxu0 0.0
      %538 = vmatpush.msra.mxu0 0.0
      %v539 = vand.u32 %v242, 4294901760
      %v540 = vsub.f32 %v242, %v539
      %v541 = vand.u32 %v540, 4294901760
      %542 = vmatpush.msra.mxu0 %v541
      %v543 = vand.u32 %v241, 4294901760
      %v544 = vsub.f32 %v241, %v543
      %v545 = vand.u32 %v544, 4294901760
      %546 = vmatpush.msra.mxu0 %v545
      %v547 = vand.u32 %v339, 4294901760
      %548 = vmatmul.f32.gmra.mxu0 %v547
      %v549 = vpop.f32.mrf.mxu0
      %v550 = vadd.f32 %v505, %v549
      %v551 = vand.u32 %v341, 4294901760
      %552 = vmatmul.f32.gmra.mxu0 %v551
      %v553 = vpop.f32.mrf.mxu0
      %v554 = vadd.f32 %v511, %v553
      %v555 = vand.u32 %v343, 4294901760
      %556 = vmatmul.f32.gmra.mxu0 %v555
      %v557 = vpop.f32.mrf.mxu0
      %v558 = vadd.f32 %v517, %v557
      %v559 = vand.u32 %v345, 4294901760
      %560 = vmatmul.f32.gmra.mxu0 %v559
      %v561 = vpop.f32.mrf.mxu0
      %v562 = vadd.f32 %v523, %v561
      %563 = vdwg.mxu0
      %564 = vmatpush.msra.mxu0 0.0
      %565 = vmatpush.msra.mxu0 0.0
      %566 = vmatpush.msra.mxu0 0.0
      %567 = vmatpush.msra.mxu0 0.0
      %568 = vmatpush.msra.mxu0 0.0
      %569 = vmatpush.msra.mxu0 0.0
      %570 = vmatpush.msra.mxu0 0.0
      %571 = vmatpush.msra.mxu0 0.0
      %572 = vmatpush.msra.mxu0 0.0
      %573 = vmatpush.msra.mxu0 0.0
      %574 = vmatpush.msra.mxu0 0.0
      %575 = vmatpush.msra.mxu0 0.0
      %576 = vmatpush.msra.mxu0 0.0
      %577 = vmatpush.msra.mxu0 0.0
      %v578 = vand.u32 %v242, 4294901760
      %579 = vmatpush.msra.mxu0 %v578
      %v580 = vand.u32 %v241, 4294901760
      %581 = vmatpush.msra.mxu0 %v580
      %v582 = vand.u32 %v339, 4294901760
      %583 = vmatmul.f32.gmra.mxu0 %v582
      %v584 = vpop.f32.mrf.mxu0
      %v585 = vadd.f32 %v550, %v584
      %v586 = vand.u32 %v341, 4294901760
      %587 = vmatmul.f32.gmra.mxu0 %v586
      %v588 = vpop.f32.mrf.mxu0
      %v589 = vadd.f32 %v554, %v588
      %v590 = vand.u32 %v343, 4294901760
      %591 = vmatmul.f32.gmra.mxu0 %v590
      %v592 = vpop.f32.mrf.mxu0
      %v593 = vadd.f32 %v558, %v592
      %v594 = vand.u32 %v345, 4294901760
      %595 = vmatmul.f32.gmra.mxu0 %v594
      %v596 = vpop.f32.mrf.mxu0
      %v597 = vadd.f32 %v562, %v596
      %598 = vdwg.mxu0
      %vm599 = vcmask 64512
      %600 = vst.msk [vmem:[%s207] sm:$0xff] %vm599, %v585
      %601 = vst.msk [vmem:[%s207 + $0x8] sm:$0xff] %vm599, %v589
      %602 = vst.msk [vmem:[%s207 + $0x10] sm:$0xff] %vm599, %v593
      %603 = vst.msk [vmem:[%s207 + $0x18] sm:$0xff] %vm599, %v597
      %s604 = scalar_lea.vmem %s1, 16
      %v605 = vld [vmem:[%s604] sm:$0xff]
      %v606 = vld [vmem:[%s604 + $0x8] sm:$0xff]
      %607 = vmatpush.msra.mxu0 0.0
      %608 = vmatpush.msra.mxu0 0.0
      %609 = vmatpush.msra.mxu0 0.0
      %610 = vmatpush.msra.mxu0 0.0
      %611 = vmatpush.msra.mxu0 0.0
      %612 = vmatpush.msra.mxu0 0.0
      %613 = vmatpush.msra.mxu0 0.0
      %614 = vmatpush.msra.mxu0 0.0
      %615 = vmatpush.msra.mxu0 0.0
      %616 = vmatpush.msra.mxu0 0.0
      %617 = vmatpush.msra.mxu0 0.0
      %618 = vmatpush.msra.mxu0 0.0
      %619 = vmatpush.msra.mxu0 0.0
      %620 = vmatpush.msra.mxu0 0.0
      %v621 = vand.u32 %v606, 4294901760
      %622 = vmatpush.msra.mxu0 %v621
      %v623 = vand.u32 %v605, 4294901760
      %624 = vmatpush.msra.mxu0 %v623
      %v625 = vand.u32 %v339, 4294901760
      %v626 = vsub.f32 %v339, %v625
      %v627 = vand.u32 %v626, 4294901760
      %v628 = vsub.f32 %v626, %v627
      %v629 = vand.u32 %v628, 4294901760
      %630 = vmatmul.f32.gmra.mxu0 %v629
      %v631 = vpop.f32.mrf.mxu0
      %v632 = vadd.f32 0.0, %v631
      %v633 = vand.u32 %v341, 4294901760
      %v634 = vsub.f32 %v341, %v633
      %v635 = vand.u32 %v634, 4294901760
      %v636 = vsub.f32 %v634, %v635
      %v637 = vand.u32 %v636, 4294901760
      %638 = vmatmul.f32.gmra.mxu0 %v637
      %v639 = vpop.f32.mrf.mxu0
      %v640 = vadd.f32 0.0, %v639
      %v641 = vand.u32 %v343, 4294901760
      %v642 = vsub.f32 %v343, %v641
      %v643 = vand.u32 %v642, 4294901760
      %v644 = vsub.f32 %v642, %v643
      %v645 = vand.u32 %v644, 4294901760
      %646 = vmatmul.f32.gmra.mxu0 %v645
      %v647 = vpop.f32.mrf.mxu0
      %v648 = vadd.f32 0.0, %v647
      %v649 = vand.u32 %v345, 4294901760
      %v650 = vsub.f32 %v345, %v649
      %v651 = vand.u32 %v650, 4294901760
      %v652 = vsub.f32 %v650, %v651
      %v653 = vand.u32 %v652, 4294901760
      %654 = vmatmul.f32.gmra.mxu0 %v653
      %v655 = vpop.f32.mrf.mxu0
      %v656 = vadd.f32 0.0, %v655
      %657 = vdwg.mxu0
      %658 = vmatpush.msra.mxu0 0.0
      %659 = vmatpush.msra.mxu0 0.0
      %660 = vmatpush.msra.mxu0 0.0
      %661 = vmatpush.msra.mxu0 0.0
      %662 = vmatpush.msra.mxu0 0.0
      %663 = vmatpush.msra.mxu0 0.0
      %664 = vmatpush.msra.mxu0 0.0
      %665 = vmatpush.msra.mxu0 0.0
      %666 = vmatpush.msra.mxu0 0.0
      %667 = vmatpush.msra.mxu0 0.0
      %668 = vmatpush.msra.mxu0 0.0
      %669 = vmatpush.msra.mxu0 0.0
      %670 = vmatpush.msra.mxu0 0.0
      %671 = vmatpush.msra.mxu0 0.0
      %v672 = vand.u32 %v606, 4294901760
      %v673 = vsub.f32 %v606, %v672
      %v674 = vand.u32 %v673, 4294901760
      %v675 = vsub.f32 %v673, %v674
      %v676 = vand.u32 %v675, 4294901760
      %677 = vmatpush.msra.mxu0 %v676
      %v678 = vand.u32 %v605, 4294901760
      %v679 = vsub.f32 %v605, %v678
      %v680 = vand.u32 %v679, 4294901760
      %v681 = vsub.f32 %v679, %v680
      %v682 = vand.u32 %v681, 4294901760
      %683 = vmatpush.msra.mxu0 %v682
      %v684 = vand.u32 %v339, 4294901760
      %685 = vmatmul.f32.gmra.mxu0 %v684
      %v686 = vpop.f32.mrf.mxu0
      %v687 = vadd.f32 %v632, %v686
      %v688 = vand.u32 %v341, 4294901760
      %689 = vmatmul.f32.gmra.mxu0 %v688
      %v690 = vpop.f32.mrf.mxu0
      %v691 = vadd.f32 %v640, %v690
      %v692 = vand.u32 %v343, 4294901760
      %693 = vmatmul.f32.gmra.mxu0 %v692
      %v694 = vpop.f32.mrf.mxu0
      %v695 = vadd.f32 %v648, %v694
      %v696 = vand.u32 %v345, 4294901760
      %697 = vmatmul.f32.gmra.mxu0 %v696
      %v698 = vpop.f32.mrf.mxu0
      %v699 = vadd.f32 %v656, %v698
      %700 = vdwg.mxu0
      %701 = vmatpush.msra.mxu0 0.0
      %702 = vmatpush.msra.mxu0 0.0
      %703 = vmatpush.msra.mxu0 0.0
      %704 = vmatpush.msra.mxu0 0.0
      %705 = vmatpush.msra.mxu0 0.0
      %706 = vmatpush.msra.mxu0 0.0
      %707 = vmatpush.msra.mxu0 0.0
      %708 = vmatpush.msra.mxu0 0.0
      %709 = vmatpush.msra.mxu0 0.0
      %710 = vmatpush.msra.mxu0 0.0
      %711 = vmatpush.msra.mxu0 0.0
      %712 = vmatpush.msra.mxu0 0.0
      %713 = vmatpush.msra.mxu0 0.0
      %714 = vmatpush.msra.mxu0 0.0
      %v715 = vand.u32 %v606, 4294901760
      %v716 = vsub.f32 %v606, %v715
      %717 = vmatpush.msra.mxu0 %v716
      %v718 = vand.u32 %v605, 4294901760
      %v719 = vsub.f32 %v605, %v718
      %720 = vmatpush.msra.mxu0 %v719
      %v721 = vand.u32 %v339, 4294901760
      %v722 = vsub.f32 %v339, %v721
      %723 = vmatmul.f32.gmra.mxu0 %v722
      %v724 = vpop.f32.mrf.mxu0
      %v725 = vadd.f32 %v687, %v724
      %v726 = vand.u32 %v341, 4294901760
      %v727 = vsub.f32 %v341, %v726
      %728 = vmatmul.f32.gmra.mxu0 %v727
      %v729 = vpop.f32.mrf.mxu0
      %v730 = vadd.f32 %v691, %v729
      %v731 = vand.u32 %v343, 4294901760
      %v732 = vsub.f32 %v343, %v731
      %733 = vmatmul.f32.gmra.mxu0 %v732
      %v734 = vpop.f32.mrf.mxu0
      %v735 = vadd.f32 %v695, %v734
      %v736 = vand.u32 %v345, 4294901760
      %v737 = vsub.f32 %v345, %v736
      %738 = vmatmul.f32.gmra.mxu0 %v737
      %v739 = vpop.f32.mrf.mxu0
      %v740 = vadd.f32 %v699, %v739
      %741 = vdwg.mxu0
      %742 = vmatpush.msra.mxu0 0.0
      %743 = vmatpush.msra.mxu0 0.0
      %744 = vmatpush.msra.mxu0 0.0
      %745 = vmatpush.msra.mxu0 0.0
      %746 = vmatpush.msra.mxu0 0.0
      %747 = vmatpush.msra.mxu0 0.0
      %748 = vmatpush.msra.mxu0 0.0
      %749 = vmatpush.msra.mxu0 0.0
      %750 = vmatpush.msra.mxu0 0.0
      %751 = vmatpush.msra.mxu0 0.0
      %752 = vmatpush.msra.mxu0 0.0
      %753 = vmatpush.msra.mxu0 0.0
      %754 = vmatpush.msra.mxu0 0.0
      %755 = vmatpush.msra.mxu0 0.0
      %v756 = vand.u32 %v606, 4294901760
      %757 = vmatpush.msra.mxu0 %v756
      %v758 = vand.u32 %v605, 4294901760
      %759 = vmatpush.msra.mxu0 %v758
      %v760 = vand.u32 %v339, 4294901760
      %v761 = vsub.f32 %v339, %v760
      %v762 = vand.u32 %v761, 4294901760
      %763 = vmatmul.f32.gmra.mxu0 %v762
      %v764 = vpop.f32.mrf.mxu0
      %v765 = vadd.f32 %v725, %v764
      %v766 = vand.u32 %v341, 4294901760
      %v767 = vsub.f32 %v341, %v766
      %v768 = vand.u32 %v767, 4294901760
      %769 = vmatmul.f32.gmra.mxu0 %v768
      %v770 = vpop.f32.mrf.mxu0
      %v771 = vadd.f32 %v730, %v770
      %v772 = vand.u32 %v343, 4294901760
      %v773 = vsub.f32 %v343, %v772
      %v774 = vand.u32 %v773, 4294901760
      %775 = vmatmul.f32.gmra.mxu0 %v774
      %v776 = vpop.f32.mrf.mxu0
      %v777 = vadd.f32 %v735, %v776
      %v778 = vand.u32 %v345, 4294901760
      %v779 = vsub.f32 %v345, %v778
      %v780 = vand.u32 %v779, 4294901760
      %781 = vmatmul.f32.gmra.mxu0 %v780
      %v782 = vpop.f32.mrf.mxu0
      %v783 = vadd.f32 %v740, %v782
      %784 = vdwg.mxu0
      %785 = vmatpush.msra.mxu0 0.0
      %786 = vmatpush.msra.mxu0 0.0
      %787 = vmatpush.msra.mxu0 0.0
      %788 = vmatpush.msra.mxu0 0.0
      %789 = vmatpush.msra.mxu0 0.0
      %790 = vmatpush.msra.mxu0 0.0
      %791 = vmatpush.msra.mxu0 0.0
      %792 = vmatpush.msra.mxu0 0.0
      %793 = vmatpush.msra.mxu0 0.0
      %794 = vmatpush.msra.mxu0 0.0
      %795 = vmatpush.msra.mxu0 0.0
      %796 = vmatpush.msra.mxu0 0.0
      %797 = vmatpush.msra.mxu0 0.0
      %798 = vmatpush.msra.mxu0 0.0
      %v799 = vand.u32 %v606, 4294901760
      %v800 = vsub.f32 %v606, %v799
      %v801 = vand.u32 %v800, 4294901760
      %802 = vmatpush.msra.mxu0 %v801
      %v803 = vand.u32 %v605, 4294901760
      %v804 = vsub.f32 %v605, %v803
      %v805 = vand.u32 %v804, 4294901760
      %806 = vmatpush.msra.mxu0 %v805
      %v807 = vand.u32 %v339, 4294901760
      %808 = vmatmul.f32.gmra.mxu0 %v807
      %v809 = vpop.f32.mrf.mxu0
      %v810 = vadd.f32 %v765, %v809
      %v811 = vand.u32 %v341, 4294901760
      %812 = vmatmul.f32.gmra.mxu0 %v811
      %v813 = vpop.f32.mrf.mxu0
      %v814 = vadd.f32 %v771, %v813
      %v815 = vand.u32 %v343, 4294901760
      %816 = vmatmul.f32.gmra.mxu0 %v815
      %v817 = vpop.f32.mrf.mxu0
      %v818 = vadd.f32 %v777, %v817
      %v819 = vand.u32 %v345, 4294901760
      %820 = vmatmul.f32.gmra.mxu0 %v819
      %v821 = vpop.f32.mrf.mxu0
      %v822 = vadd.f32 %v783, %v821
      %823 = vdwg.mxu0
      %824 = vmatpush.msra.mxu0 0.0
      %825 = vmatpush.msra.mxu0 0.0
      %826 = vmatpush.msra.mxu0 0.0
      %827 = vmatpush.msra.mxu0 0.0
      %828 = vmatpush.msra.mxu0 0.0
      %829 = vmatpush.msra.mxu0 0.0
      %830 = vmatpush.msra.mxu0 0.0
      %831 = vmatpush.msra.mxu0 0.0
      %832 = vmatpush.msra.mxu0 0.0
      %833 = vmatpush.msra.mxu0 0.0
      %834 = vmatpush.msra.mxu0 0.0
      %835 = vmatpush.msra.mxu0 0.0
      %836 = vmatpush.msra.mxu0 0.0
      %837 = vmatpush.msra.mxu0 0.0
      %v838 = vand.u32 %v606, 4294901760
      %839 = vmatpush.msra.mxu0 %v838
      %v840 = vand.u32 %v605, 4294901760
      %841 = vmatpush.msra.mxu0 %v840
      %v842 = vand.u32 %v339, 4294901760
      %843 = vmatmul.f32.gmra.mxu0 %v842
      %v844 = vpop.f32.mrf.mxu0
      %v845 = vadd.f32 %v810, %v844
      %v846 = vand.u32 %v341, 4294901760
      %847 = vmatmul.f32.gmra.mxu0 %v846
      %v848 = vpop.f32.mrf.mxu0
      %v849 = vadd.f32 %v814, %v848
      %v850 = vand.u32 %v343, 4294901760
      %851 = vmatmul.f32.gmra.mxu0 %v850
      %v852 = vpop.f32.mrf.mxu0
      %v853 = vadd.f32 %v818, %v852
      %v854 = vand.u32 %v345, 4294901760
      %855 = vmatmul.f32.gmra.mxu0 %v854
      %v856 = vpop.f32.mrf.mxu0
      %v857 = vadd.f32 %v822, %v856
      %858 = vdwg.mxu0
      %s859 = scalar_lea.vmem %s207, 32
      %860 = vst.msk [vmem:[%s859] sm:$0xff] %vm599, %v845
      %861 = vst.msk [vmem:[%s859 + $0x8] sm:$0xff] %vm599, %v849
      %862 = vst.msk [vmem:[%s859 + $0x10] sm:$0xff] %vm599, %v853
      %863 = vst.msk [vmem:[%s859 + $0x18] sm:$0xff] %vm599, %v857
      %v864 = vld [vmem:[%s194 + $0x1] sm:$0x1]
      %v865 = vld [vmem:[%s194 + $0x3] sm:$0x1]
      %v866 = vld [vmem:[%s194 + $0x5] sm:$0x1]
      %v867 = vld [vmem:[%s194 + $0x7] sm:$0x1]
      %v868 = vld [vmem:[%s194 + $0x9] sm:$0x1]
      %v869 = vld [vmem:[%s194 + $0xb] sm:$0x1]
      %v870 = vld [vmem:[%s194 + $0xd] sm:$0x1]
      %v871 = vld [vmem:[%s194 + $0xf] sm:$0x1]
      %v872 = vld [vmem:[%s194 + $0x11] sm:$0x1]
      %v873 = vld [vmem:[%s194 + $0x13] sm:$0x1]
      %v874 = vld [vmem:[%s194 + $0x15] sm:$0x1]
      %v875 = vld [vmem:[%s194 + $0x17] sm:$0x1]
      %v876 = vld [vmem:[%s194 + $0x19] sm:$0x1]
      %v877 = vld [vmem:[%s194 + $0x1b] sm:$0x1]
      %v878 = vld [vmem:[%s194 + $0x1d] sm:$0x1]
      %v879 = vld [vmem:[%s194 + $0x1f] sm:$0x1]
      %v880 = vld [vmem:[%s194 + $0x21] sm:$0x1]
      %v881 = vld [vmem:[%s194 + $0x23] sm:$0x1]
      %v882 = vld [vmem:[%s194 + $0x25] sm:$0x1]
      %v883 = vld [vmem:[%s194 + $0x27] sm:$0x1]
      %v884 = vld [vmem:[%s194 + $0x29] sm:$0x1]
      %v885 = vld [vmem:[%s194 + $0x2b] sm:$0x1]
      %v886 = vld [vmem:[%s194 + $0x2d] sm:$0x1]
      %v887 = vld [vmem:[%s194 + $0x2f] sm:$0x1]
      %v888 = vld [vmem:[%s194 + $0x31] sm:$0x1]
      %v889 = vld [vmem:[%s194 + $0x33] sm:$0x1]
      %v890 = vld [vmem:[%s194 + $0x35] sm:$0x1]
      %v891 = vld [vmem:[%s194 + $0x37] sm:$0x1]
      %v892 = vld [vmem:[%s194 + $0x39] sm:$0x1]
      %v893 = vld [vmem:[%s194 + $0x3b] sm:$0x1]
      %v894 = vld [vmem:[%s194 + $0x3d] sm:$0x1]
      %v895 = vld [vmem:[%s194 + $0x3f] sm:$0x1]
      %v896 = vld [vmem:[%s1] sm:$0xff]
      %v897 = vld [vmem:[%s1 + $0x8] sm:$0xff]
      %v930 = vrot.slane %v865, 7
      %v931 = vsel %vm276, %v930, %v864
      %v932 = vrot.slane %v866, 6
      %v933 = vsel %vm279, %v932, %v931
      %v934 = vrot.slane %v867, 5
      %v935 = vsel %vm282, %v934, %v933
      %v936 = vrot.slane %v868, 4
      %v937 = vsel %vm285, %v936, %v935
      %v938 = vrot.slane %v869, 3
      %v939 = vsel %vm288, %v938, %v937
      %v940 = vrot.slane %v870, 2
      %v941 = vsel %vm291, %v940, %v939
      %v942 = vrot.slane %v871, 1
      %v943 = vsel %vm294, %v942, %v941
      %v944 = vrot.slane %v873, 7
      %v945 = vsel %vm276, %v944, %v872
      %v946 = vrot.slane %v874, 6
      %v947 = vsel %vm279, %v946, %v945
      %v948 = vrot.slane %v875, 5
      %v949 = vsel %vm282, %v948, %v947
      %v950 = vrot.slane %v876, 4
      %v951 = vsel %vm285, %v950, %v949
      %v952 = vrot.slane %v877, 3
      %v953 = vsel %vm288, %v952, %v951
      %v954 = vrot.slane %v878, 2
      %v955 = vsel %vm291, %v954, %v953
      %v956 = vrot.slane %v879, 1
      %v957 = vsel %vm294, %v956, %v955
      %v958 = vrot.slane %v881, 7
      %v959 = vsel %vm276, %v958, %v880
      %v960 = vrot.slane %v882, 6
      %v961 = vsel %vm279, %v960, %v959
      %v962 = vrot.slane %v883, 5
      %v963 = vsel %vm282, %v962, %v961
      %v964 = vrot.slane %v884, 4
      %v965 = vsel %vm285, %v964, %v963
      %v966 = vrot.slane %v885, 3
      %v967 = vsel %vm288, %v966, %v965
      %v968 = vrot.slane %v886, 2
      %v969 = vsel %vm291, %v968, %v967
      %v970 = vrot.slane %v887, 1
      %v971 = vsel %vm294, %v970, %v969
      %v972 = vrot.slane %v889, 7
      %v973 = vsel %vm276, %v972, %v888
      %v974 = vrot.slane %v890, 6
      %v975 = vsel %vm279, %v974, %v973
      %v976 = vrot.slane %v891, 5
      %v977 = vsel %vm282, %v976, %v975
      %v978 = vrot.slane %v892, 4
      %v979 = vsel %vm285, %v978, %v977
      %v980 = vrot.slane %v893, 3
      %v981 = vsel %vm288, %v980, %v979
      %v982 = vrot.slane %v894, 2
      %v983 = vsel %vm291, %v982, %v981
      %v984 = vrot.slane %v895, 1
      %v985 = vsel %vm294, %v984, %v983
      %v986 = vsel %vm338, %v943, 0
      %v988 = vsel %vm338, %v957, 0
      %v990 = vsel %vm338, %v971, 0
      %v992 = vsel %vm338, %v985, 0
      %994 = vmatpush.msra.mxu0 0.0
      %995 = vmatpush.msra.mxu0 0.0
      %996 = vmatpush.msra.mxu0 0.0
      %997 = vmatpush.msra.mxu0 0.0
      %998 = vmatpush.msra.mxu0 0.0
      %999 = vmatpush.msra.mxu0 0.0
      %1000 = vmatpush.msra.mxu0 0.0
      %1001 = vmatpush.msra.mxu0 0.0
      %1002 = vmatpush.msra.mxu0 0.0
      %1003 = vmatpush.msra.mxu0 0.0
      %1004 = vmatpush.msra.mxu0 0.0
      %1005 = vmatpush.msra.mxu0 0.0
      %1006 = vmatpush.msra.mxu0 0.0
      %1007 = vmatpush.msra.mxu0 0.0
      %v1008 = vand.u32 %v897, 4294901760
      %1009 = vmatpush.msra.mxu0 %v1008
      %v1010 = vand.u32 %v896, 4294901760
      %1011 = vmatpush.msra.mxu0 %v1010
      %v1012 = vand.u32 %v986, 4294901760
      %v1013 = vsub.f32 %v986, %v1012
      %v1014 = vand.u32 %v1013, 4294901760
      %v1015 = vsub.f32 %v1013, %v1014
      %v1016 = vand.u32 %v1015, 4294901760
      %1017 = vmatmul.f32.gmra.mxu0 %v1016
      %v1018 = vpop.f32.mrf.mxu0
      %v1019 = vadd.f32 0.0, %v1018
      %v1020 = vand.u32 %v988, 4294901760
      %v1021 = vsub.f32 %v988, %v1020
      %v1022 = vand.u32 %v1021, 4294901760
      %v1023 = vsub.f32 %v1021, %v1022
      %v1024 = vand.u32 %v1023, 4294901760
      %1025 = vmatmul.f32.gmra.mxu0 %v1024
      %v1026 = vpop.f32.mrf.mxu0
      %v1027 = vadd.f32 0.0, %v1026
      %v1028 = vand.u32 %v990, 4294901760
      %v1029 = vsub.f32 %v990, %v1028
      %v1030 = vand.u32 %v1029, 4294901760
      %v1031 = vsub.f32 %v1029, %v1030
      %v1032 = vand.u32 %v1031, 4294901760
      %1033 = vmatmul.f32.gmra.mxu0 %v1032
      %v1034 = vpop.f32.mrf.mxu0
      %v1035 = vadd.f32 0.0, %v1034
      %v1036 = vand.u32 %v992, 4294901760
      %v1037 = vsub.f32 %v992, %v1036
      %v1038 = vand.u32 %v1037, 4294901760
      %v1039 = vsub.f32 %v1037, %v1038
      %v1040 = vand.u32 %v1039, 4294901760
      %1041 = vmatmul.f32.gmra.mxu0 %v1040
      %v1042 = vpop.f32.mrf.mxu0
      %v1043 = vadd.f32 0.0, %v1042
      %1044 = vdwg.mxu0
      %1045 = vmatpush.msra.mxu0 0.0
      %1046 = vmatpush.msra.mxu0 0.0
      %1047 = vmatpush.msra.mxu0 0.0
      %1048 = vmatpush.msra.mxu0 0.0
      %1049 = vmatpush.msra.mxu0 0.0
      %1050 = vmatpush.msra.mxu0 0.0
      %1051 = vmatpush.msra.mxu0 0.0
      %1052 = vmatpush.msra.mxu0 0.0
      %1053 = vmatpush.msra.mxu0 0.0
      %1054 = vmatpush.msra.mxu0 0.0
      %1055 = vmatpush.msra.mxu0 0.0
      %1056 = vmatpush.msra.mxu0 0.0
      %1057 = vmatpush.msra.mxu0 0.0
      %1058 = vmatpush.msra.mxu0 0.0
      %v1059 = vand.u32 %v897, 4294901760
      %v1060 = vsub.f32 %v897, %v1059
      %v1061 = vand.u32 %v1060, 4294901760
      %v1062 = vsub.f32 %v1060, %v1061
      %v1063 = vand.u32 %v1062, 4294901760
      %1064 = vmatpush.msra.mxu0 %v1063
      %v1065 = vand.u32 %v896, 4294901760
      %v1066 = vsub.f32 %v896, %v1065
      %v1067 = vand.u32 %v1066, 4294901760
      %v1068 = vsub.f32 %v1066, %v1067
      %v1069 = vand.u32 %v1068, 4294901760
      %1070 = vmatpush.msra.mxu0 %v1069
      %v1071 = vand.u32 %v986, 4294901760
      %1072 = vmatmul.f32.gmra.mxu0 %v1071
      %v1073 = vpop.f32.mrf.mxu0
      %v1074 = vadd.f32 %v1019, %v1073
      %v1075 = vand.u32 %v988, 4294901760
      %1076 = vmatmul.f32.gmra.mxu0 %v1075
      %v1077 = vpop.f32.mrf.mxu0
      %v1078 = vadd.f32 %v1027, %v1077
      %v1079 = vand.u32 %v990, 4294901760
      %1080 = vmatmul.f32.gmra.mxu0 %v1079
      %v1081 = vpop.f32.mrf.mxu0
      %v1082 = vadd.f32 %v1035, %v1081
      %v1083 = vand.u32 %v992, 4294901760
      %1084 = vmatmul.f32.gmra.mxu0 %v1083
      %v1085 = vpop.f32.mrf.mxu0
      %v1086 = vadd.f32 %v1043, %v1085
      %1087 = vdwg.mxu0
      %1088 = vmatpush.msra.mxu0 0.0
      %1089 = vmatpush.msra.mxu0 0.0
      %1090 = vmatpush.msra.mxu0 0.0
      %1091 = vmatpush.msra.mxu0 0.0
      %1092 = vmatpush.msra.mxu0 0.0
      %1093 = vmatpush.msra.mxu0 0.0
      %1094 = vmatpush.msra.mxu0 0.0
      %1095 = vmatpush.msra.mxu0 0.0
      %1096 = vmatpush.msra.mxu0 0.0
      %1097 = vmatpush.msra.mxu0 0.0
      %1098 = vmatpush.msra.mxu0 0.0
      %1099 = vmatpush.msra.mxu0 0.0
      %1100 = vmatpush.msra.mxu0 0.0
      %1101 = vmatpush.msra.mxu0 0.0
      %v1102 = vand.u32 %v897, 4294901760
      %v1103 = vsub.f32 %v897, %v1102
      %1104 = vmatpush.msra.mxu0 %v1103
      %v1105 = vand.u32 %v896, 4294901760
      %v1106 = vsub.f32 %v896, %v1105
      %1107 = vmatpush.msra.mxu0 %v1106
      %v1108 = vand.u32 %v986, 4294901760
      %v1109 = vsub.f32 %v986, %v1108
      %1110 = vmatmul.f32.gmra.mxu0 %v1109
      %v1111 = vpop.f32.mrf.mxu0
      %v1112 = vadd.f32 %v1074, %v1111
      %v1113 = vand.u32 %v988, 4294901760
      %v1114 = vsub.f32 %v988, %v1113
      %1115 = vmatmul.f32.gmra.mxu0 %v1114
      %v1116 = vpop.f32.mrf.mxu0
      %v1117 = vadd.f32 %v1078, %v1116
      %v1118 = vand.u32 %v990, 4294901760
      %v1119 = vsub.f32 %v990, %v1118
      %1120 = vmatmul.f32.gmra.mxu0 %v1119
      %v1121 = vpop.f32.mrf.mxu0
      %v1122 = vadd.f32 %v1082, %v1121
      %v1123 = vand.u32 %v992, 4294901760
      %v1124 = vsub.f32 %v992, %v1123
      %1125 = vmatmul.f32.gmra.mxu0 %v1124
      %v1126 = vpop.f32.mrf.mxu0
      %v1127 = vadd.f32 %v1086, %v1126
      %1128 = vdwg.mxu0
      %1129 = vmatpush.msra.mxu0 0.0
      %1130 = vmatpush.msra.mxu0 0.0
      %1131 = vmatpush.msra.mxu0 0.0
      %1132 = vmatpush.msra.mxu0 0.0
      %1133 = vmatpush.msra.mxu0 0.0
      %1134 = vmatpush.msra.mxu0 0.0
      %1135 = vmatpush.msra.mxu0 0.0
      %1136 = vmatpush.msra.mxu0 0.0
      %1137 = vmatpush.msra.mxu0 0.0
      %1138 = vmatpush.msra.mxu0 0.0
      %1139 = vmatpush.msra.mxu0 0.0
      %1140 = vmatpush.msra.mxu0 0.0
      %1141 = vmatpush.msra.mxu0 0.0
      %1142 = vmatpush.msra.mxu0 0.0
      %v1143 = vand.u32 %v897, 4294901760
      %1144 = vmatpush.msra.mxu0 %v1143
      %v1145 = vand.u32 %v896, 4294901760
      %1146 = vmatpush.msra.mxu0 %v1145
      %v1147 = vand.u32 %v986, 4294901760
      %v1148 = vsub.f32 %v986, %v1147
      %v1149 = vand.u32 %v1148, 4294901760
      %1150 = vmatmul.f32.gmra.mxu0 %v1149
      %v1151 = vpop.f32.mrf.mxu0
      %v1152 = vadd.f32 %v1112, %v1151
      %v1153 = vand.u32 %v988, 4294901760
      %v1154 = vsub.f32 %v988, %v1153
      %v1155 = vand.u32 %v1154, 4294901760
      %1156 = vmatmul.f32.gmra.mxu0 %v1155
      %v1157 = vpop.f32.mrf.mxu0
      %v1158 = vadd.f32 %v1117, %v1157
      %v1159 = vand.u32 %v990, 4294901760
      %v1160 = vsub.f32 %v990, %v1159
      %v1161 = vand.u32 %v1160, 4294901760
      %1162 = vmatmul.f32.gmra.mxu0 %v1161
      %v1163 = vpop.f32.mrf.mxu0
      %v1164 = vadd.f32 %v1122, %v1163
      %v1165 = vand.u32 %v992, 4294901760
      %v1166 = vsub.f32 %v992, %v1165
      %v1167 = vand.u32 %v1166, 4294901760
      %1168 = vmatmul.f32.gmra.mxu0 %v1167
      %v1169 = vpop.f32.mrf.mxu0
      %v1170 = vadd.f32 %v1127, %v1169
      %1171 = vdwg.mxu0
      %1172 = vmatpush.msra.mxu0 0.0
      %1173 = vmatpush.msra.mxu0 0.0
      %1174 = vmatpush.msra.mxu0 0.0
      %1175 = vmatpush.msra.mxu0 0.0
      %1176 = vmatpush.msra.mxu0 0.0
      %1177 = vmatpush.msra.mxu0 0.0
      %1178 = vmatpush.msra.mxu0 0.0
      %1179 = vmatpush.msra.mxu0 0.0
      %1180 = vmatpush.msra.mxu0 0.0
      %1181 = vmatpush.msra.mxu0 0.0
      %1182 = vmatpush.msra.mxu0 0.0
      %1183 = vmatpush.msra.mxu0 0.0
      %1184 = vmatpush.msra.mxu0 0.0
      %1185 = vmatpush.msra.mxu0 0.0
      %v1186 = vand.u32 %v897, 4294901760
      %v1187 = vsub.f32 %v897, %v1186
      %v1188 = vand.u32 %v1187, 4294901760
      %1189 = vmatpush.msra.mxu0 %v1188
      %v1190 = vand.u32 %v896, 4294901760
      %v1191 = vsub.f32 %v896, %v1190
      %v1192 = vand.u32 %v1191, 4294901760
      %1193 = vmatpush.msra.mxu0 %v1192
      %v1194 = vand.u32 %v986, 4294901760
      %1195 = vmatmul.f32.gmra.mxu0 %v1194
      %v1196 = vpop.f32.mrf.mxu0
      %v1197 = vadd.f32 %v1152, %v1196
      %v1198 = vand.u32 %v988, 4294901760
      %1199 = vmatmul.f32.gmra.mxu0 %v1198
      %v1200 = vpop.f32.mrf.mxu0
      %v1201 = vadd.f32 %v1158, %v1200
      %v1202 = vand.u32 %v990, 4294901760
      %1203 = vmatmul.f32.gmra.mxu0 %v1202
      %v1204 = vpop.f32.mrf.mxu0
      %v1205 = vadd.f32 %v1164, %v1204
      %v1206 = vand.u32 %v992, 4294901760
      %1207 = vmatmul.f32.gmra.mxu0 %v1206
      %v1208 = vpop.f32.mrf.mxu0
      %v1209 = vadd.f32 %v1170, %v1208
      %1210 = vdwg.mxu0
      %1211 = vmatpush.msra.mxu0 0.0
      %1212 = vmatpush.msra.mxu0 0.0
      %1213 = vmatpush.msra.mxu0 0.0
      %1214 = vmatpush.msra.mxu0 0.0
      %1215 = vmatpush.msra.mxu0 0.0
      %1216 = vmatpush.msra.mxu0 0.0
      %1217 = vmatpush.msra.mxu0 0.0
      %1218 = vmatpush.msra.mxu0 0.0
      %1219 = vmatpush.msra.mxu0 0.0
      %1220 = vmatpush.msra.mxu0 0.0
      %1221 = vmatpush.msra.mxu0 0.0
      %1222 = vmatpush.msra.mxu0 0.0
      %1223 = vmatpush.msra.mxu0 0.0
      %1224 = vmatpush.msra.mxu0 0.0
      %v1225 = vand.u32 %v897, 4294901760
      %1226 = vmatpush.msra.mxu0 %v1225
      %v1227 = vand.u32 %v896, 4294901760
      %1228 = vmatpush.msra.mxu0 %v1227
      %v1229 = vand.u32 %v986, 4294901760
      %1230 = vmatmul.f32.gmra.mxu0 %v1229
      %v1231 = vpop.f32.mrf.mxu0
      %v1232 = vadd.f32 %v1197, %v1231
      %v1233 = vand.u32 %v988, 4294901760
      %1234 = vmatmul.f32.gmra.mxu0 %v1233
      %v1235 = vpop.f32.mrf.mxu0
      %v1236 = vadd.f32 %v1201, %v1235
      %v1237 = vand.u32 %v990, 4294901760
      %1238 = vmatmul.f32.gmra.mxu0 %v1237
      %v1239 = vpop.f32.mrf.mxu0
      %v1240 = vadd.f32 %v1205, %v1239
      %v1241 = vand.u32 %v992, 4294901760
      %1242 = vmatmul.f32.gmra.mxu0 %v1241
      %v1243 = vpop.f32.mrf.mxu0
      %v1244 = vadd.f32 %v1209, %v1243
      %1245 = vdwg.mxu0
      %s1246 = scalar_lea.vmem %s207, 64
      %1247 = vst.msk [vmem:[%s1246] sm:$0xff] %vm599, %v1232
      %1248 = vst.msk [vmem:[%s1246 + $0x8] sm:$0xff] %vm599, %v1236
      %1249 = vst.msk [vmem:[%s1246 + $0x10] sm:$0xff] %vm599, %v1240
      %1250 = vst.msk [vmem:[%s1246 + $0x18] sm:$0xff] %vm599, %v1244
      %v1251 = vld [vmem:[%s604] sm:$0xff]
      %v1252 = vld [vmem:[%s604 + $0x8] sm:$0xff]
      %1253 = vmatpush.msra.mxu0 0.0
      %1254 = vmatpush.msra.mxu0 0.0
      %1255 = vmatpush.msra.mxu0 0.0
      %1256 = vmatpush.msra.mxu0 0.0
      %1257 = vmatpush.msra.mxu0 0.0
      %1258 = vmatpush.msra.mxu0 0.0
      %1259 = vmatpush.msra.mxu0 0.0
      %1260 = vmatpush.msra.mxu0 0.0
      %1261 = vmatpush.msra.mxu0 0.0
      %1262 = vmatpush.msra.mxu0 0.0
      %1263 = vmatpush.msra.mxu0 0.0
      %1264 = vmatpush.msra.mxu0 0.0
      %1265 = vmatpush.msra.mxu0 0.0
      %1266 = vmatpush.msra.mxu0 0.0
      %v1267 = vand.u32 %v1252, 4294901760
      %1268 = vmatpush.msra.mxu0 %v1267
      %v1269 = vand.u32 %v1251, 4294901760
      %1270 = vmatpush.msra.mxu0 %v1269
      %v1271 = vand.u32 %v986, 4294901760
      %v1272 = vsub.f32 %v986, %v1271
      %v1273 = vand.u32 %v1272, 4294901760
      %v1274 = vsub.f32 %v1272, %v1273
      %v1275 = vand.u32 %v1274, 4294901760
      %1276 = vmatmul.f32.gmra.mxu0 %v1275
      %v1277 = vpop.f32.mrf.mxu0
      %v1278 = vadd.f32 0.0, %v1277
      %v1279 = vand.u32 %v988, 4294901760
      %v1280 = vsub.f32 %v988, %v1279
      %v1281 = vand.u32 %v1280, 4294901760
      %v1282 = vsub.f32 %v1280, %v1281
      %v1283 = vand.u32 %v1282, 4294901760
      %1284 = vmatmul.f32.gmra.mxu0 %v1283
      %v1285 = vpop.f32.mrf.mxu0
      %v1286 = vadd.f32 0.0, %v1285
      %v1287 = vand.u32 %v990, 4294901760
      %v1288 = vsub.f32 %v990, %v1287
      %v1289 = vand.u32 %v1288, 4294901760
      %v1290 = vsub.f32 %v1288, %v1289
      %v1291 = vand.u32 %v1290, 4294901760
      %1292 = vmatmul.f32.gmra.mxu0 %v1291
      %v1293 = vpop.f32.mrf.mxu0
      %v1294 = vadd.f32 0.0, %v1293
      %v1295 = vand.u32 %v992, 4294901760
      %v1296 = vsub.f32 %v992, %v1295
      %v1297 = vand.u32 %v1296, 4294901760
      %v1298 = vsub.f32 %v1296, %v1297
      %v1299 = vand.u32 %v1298, 4294901760
      %1300 = vmatmul.f32.gmra.mxu0 %v1299
      %v1301 = vpop.f32.mrf.mxu0
      %v1302 = vadd.f32 0.0, %v1301
      %1303 = vdwg.mxu0
      %1304 = vmatpush.msra.mxu0 0.0
      %1305 = vmatpush.msra.mxu0 0.0
      %1306 = vmatpush.msra.mxu0 0.0
      %1307 = vmatpush.msra.mxu0 0.0
      %1308 = vmatpush.msra.mxu0 0.0
      %1309 = vmatpush.msra.mxu0 0.0
      %1310 = vmatpush.msra.mxu0 0.0
      %1311 = vmatpush.msra.mxu0 0.0
      %1312 = vmatpush.msra.mxu0 0.0
      %1313 = vmatpush.msra.mxu0 0.0
      %1314 = vmatpush.msra.mxu0 0.0
      %1315 = vmatpush.msra.mxu0 0.0
      %1316 = vmatpush.msra.mxu0 0.0
      %1317 = vmatpush.msra.mxu0 0.0
      %v1318 = vand.u32 %v1252, 4294901760
      %v1319 = vsub.f32 %v1252, %v1318
      %v1320 = vand.u32 %v1319, 4294901760
      %v1321 = vsub.f32 %v1319, %v1320
      %v1322 = vand.u32 %v1321, 4294901760
      %1323 = vmatpush.msra.mxu0 %v1322
      %v1324 = vand.u32 %v1251, 4294901760
      %v1325 = vsub.f32 %v1251, %v1324
      %v1326 = vand.u32 %v1325, 4294901760
      %v1327 = vsub.f32 %v1325, %v1326
      %v1328 = vand.u32 %v1327, 4294901760
      %1329 = vmatpush.msra.mxu0 %v1328
      %v1330 = vand.u32 %v986, 4294901760
      %1331 = vmatmul.f32.gmra.mxu0 %v1330
      %v1332 = vpop.f32.mrf.mxu0
      %v1333 = vadd.f32 %v1278, %v1332
      %v1334 = vand.u32 %v988, 4294901760
      %1335 = vmatmul.f32.gmra.mxu0 %v1334
      %v1336 = vpop.f32.mrf.mxu0
      %v1337 = vadd.f32 %v1286, %v1336
      %v1338 = vand.u32 %v990, 4294901760
      %1339 = vmatmul.f32.gmra.mxu0 %v1338
      %v1340 = vpop.f32.mrf.mxu0
      %v1341 = vadd.f32 %v1294, %v1340
      %v1342 = vand.u32 %v992, 4294901760
      %1343 = vmatmul.f32.gmra.mxu0 %v1342
      %v1344 = vpop.f32.mrf.mxu0
      %v1345 = vadd.f32 %v1302, %v1344
      %1346 = vdwg.mxu0
      %1347 = vmatpush.msra.mxu0 0.0
      %1348 = vmatpush.msra.mxu0 0.0
      %1349 = vmatpush.msra.mxu0 0.0
      %1350 = vmatpush.msra.mxu0 0.0
      %1351 = vmatpush.msra.mxu0 0.0
      %1352 = vmatpush.msra.mxu0 0.0
      %1353 = vmatpush.msra.mxu0 0.0
      %1354 = vmatpush.msra.mxu0 0.0
      %1355 = vmatpush.msra.mxu0 0.0
      %1356 = vmatpush.msra.mxu0 0.0
      %1357 = vmatpush.msra.mxu0 0.0
      %1358 = vmatpush.msra.mxu0 0.0
      %1359 = vmatpush.msra.mxu0 0.0
      %1360 = vmatpush.msra.mxu0 0.0
      %v1361 = vand.u32 %v1252, 4294901760
      %v1362 = vsub.f32 %v1252, %v1361
      %1363 = vmatpush.msra.mxu0 %v1362
      %v1364 = vand.u32 %v1251, 4294901760
      %v1365 = vsub.f32 %v1251, %v1364
      %1366 = vmatpush.msra.mxu0 %v1365
      %v1367 = vand.u32 %v986, 4294901760
      %v1368 = vsub.f32 %v986, %v1367
      %1369 = vmatmul.f32.gmra.mxu0 %v1368
      %v1370 = vpop.f32.mrf.mxu0
      %v1371 = vadd.f32 %v1333, %v1370
      %v1372 = vand.u32 %v988, 4294901760
      %v1373 = vsub.f32 %v988, %v1372
      %1374 = vmatmul.f32.gmra.mxu0 %v1373
      %v1375 = vpop.f32.mrf.mxu0
      %v1376 = vadd.f32 %v1337, %v1375
      %v1377 = vand.u32 %v990, 4294901760
      %v1378 = vsub.f32 %v990, %v1377
      %1379 = vmatmul.f32.gmra.mxu0 %v1378
      %v1380 = vpop.f32.mrf.mxu0
      %v1381 = vadd.f32 %v1341, %v1380
      %v1382 = vand.u32 %v992, 4294901760
      %v1383 = vsub.f32 %v992, %v1382
      %1384 = vmatmul.f32.gmra.mxu0 %v1383
      %v1385 = vpop.f32.mrf.mxu0
      %v1386 = vadd.f32 %v1345, %v1385
      %1387 = vdwg.mxu0
      %1388 = vmatpush.msra.mxu0 0.0
      %1389 = vmatpush.msra.mxu0 0.0
      %1390 = vmatpush.msra.mxu0 0.0
      %1391 = vmatpush.msra.mxu0 0.0
      %1392 = vmatpush.msra.mxu0 0.0
      %1393 = vmatpush.msra.mxu0 0.0
      %1394 = vmatpush.msra.mxu0 0.0
      %1395 = vmatpush.msra.mxu0 0.0
      %1396 = vmatpush.msra.mxu0 0.0
      %1397 = vmatpush.msra.mxu0 0.0
      %1398 = vmatpush.msra.mxu0 0.0
      %1399 = vmatpush.msra.mxu0 0.0
      %1400 = vmatpush.msra.mxu0 0.0
      %1401 = vmatpush.msra.mxu0 0.0
      %v1402 = vand.u32 %v1252, 4294901760
      %1403 = vmatpush.msra.mxu0 %v1402
      %v1404 = vand.u32 %v1251, 4294901760
      %1405 = vmatpush.msra.mxu0 %v1404
      %v1406 = vand.u32 %v986, 4294901760
      %v1407 = vsub.f32 %v986, %v1406
      %v1408 = vand.u32 %v1407, 4294901760
      %1409 = vmatmul.f32.gmra.mxu0 %v1408
      %v1410 = vpop.f32.mrf.mxu0
      %v1411 = vadd.f32 %v1371, %v1410
      %v1412 = vand.u32 %v988, 4294901760
      %v1413 = vsub.f32 %v988, %v1412
      %v1414 = vand.u32 %v1413, 4294901760
      %1415 = vmatmul.f32.gmra.mxu0 %v1414
      %v1416 = vpop.f32.mrf.mxu0
      %v1417 = vadd.f32 %v1376, %v1416
      %v1418 = vand.u32 %v990, 4294901760
      %v1419 = vsub.f32 %v990, %v1418
      %v1420 = vand.u32 %v1419, 4294901760
      %1421 = vmatmul.f32.gmra.mxu0 %v1420
      %v1422 = vpop.f32.mrf.mxu0
      %v1423 = vadd.f32 %v1381, %v1422
      %v1424 = vand.u32 %v992, 4294901760
      %v1425 = vsub.f32 %v992, %v1424
      %v1426 = vand.u32 %v1425, 4294901760
      %1427 = vmatmul.f32.gmra.mxu0 %v1426
      %v1428 = vpop.f32.mrf.mxu0
      %v1429 = vadd.f32 %v1386, %v1428
      %1430 = vdwg.mxu0
      %1431 = vmatpush.msra.mxu0 0.0
      %1432 = vmatpush.msra.mxu0 0.0
      %1433 = vmatpush.msra.mxu0 0.0
      %1434 = vmatpush.msra.mxu0 0.0
      %1435 = vmatpush.msra.mxu0 0.0
      %1436 = vmatpush.msra.mxu0 0.0
      %1437 = vmatpush.msra.mxu0 0.0
      %1438 = vmatpush.msra.mxu0 0.0
      %1439 = vmatpush.msra.mxu0 0.0
      %1440 = vmatpush.msra.mxu0 0.0
      %1441 = vmatpush.msra.mxu0 0.0
      %1442 = vmatpush.msra.mxu0 0.0
      %1443 = vmatpush.msra.mxu0 0.0
      %1444 = vmatpush.msra.mxu0 0.0
      %v1445 = vand.u32 %v1252, 4294901760
      %v1446 = vsub.f32 %v1252, %v1445
      %v1447 = vand.u32 %v1446, 4294901760
      %1448 = vmatpush.msra.mxu0 %v1447
      %v1449 = vand.u32 %v1251, 4294901760
      %v1450 = vsub.f32 %v1251, %v1449
      %v1451 = vand.u32 %v1450, 4294901760
      %1452 = vmatpush.msra.mxu0 %v1451
      %v1453 = vand.u32 %v986, 4294901760
      %1454 = vmatmul.f32.gmra.mxu0 %v1453
      %v1455 = vpop.f32.mrf.mxu0
      %v1456 = vadd.f32 %v1411, %v1455
      %v1457 = vand.u32 %v988, 4294901760
      %1458 = vmatmul.f32.gmra.mxu0 %v1457
      %v1459 = vpop.f32.mrf.mxu0
      %v1460 = vadd.f32 %v1417, %v1459
      %v1461 = vand.u32 %v990, 4294901760
      %1462 = vmatmul.f32.gmra.mxu0 %v1461
      %v1463 = vpop.f32.mrf.mxu0
      %v1464 = vadd.f32 %v1423, %v1463
      %v1465 = vand.u32 %v992, 4294901760
      %1466 = vmatmul.f32.gmra.mxu0 %v1465
      %v1467 = vpop.f32.mrf.mxu0
      %v1468 = vadd.f32 %v1429, %v1467
      %1469 = vdwg.mxu0
      %1470 = vmatpush.msra.mxu0 0.0
      %1471 = vmatpush.msra.mxu0 0.0
      %1472 = vmatpush.msra.mxu0 0.0
      %1473 = vmatpush.msra.mxu0 0.0
      %1474 = vmatpush.msra.mxu0 0.0
      %1475 = vmatpush.msra.mxu0 0.0
      %1476 = vmatpush.msra.mxu0 0.0
      %1477 = vmatpush.msra.mxu0 0.0
      %1478 = vmatpush.msra.mxu0 0.0
      %1479 = vmatpush.msra.mxu0 0.0
      %1480 = vmatpush.msra.mxu0 0.0
      %1481 = vmatpush.msra.mxu0 0.0
      %1482 = vmatpush.msra.mxu0 0.0
      %1483 = vmatpush.msra.mxu0 0.0
      %v1484 = vand.u32 %v1252, 4294901760
      %1485 = vmatpush.msra.mxu0 %v1484
      %v1486 = vand.u32 %v1251, 4294901760
      %1487 = vmatpush.msra.mxu0 %v1486
      %v1488 = vand.u32 %v986, 4294901760
      %1489 = vmatmul.f32.gmra.mxu0 %v1488
      %v1490 = vpop.f32.mrf.mxu0
      %v1491 = vadd.f32 %v1456, %v1490
      %v1492 = vand.u32 %v988, 4294901760
      %1493 = vmatmul.f32.gmra.mxu0 %v1492
      %v1494 = vpop.f32.mrf.mxu0
      %v1495 = vadd.f32 %v1460, %v1494
      %v1496 = vand.u32 %v990, 4294901760
      %1497 = vmatmul.f32.gmra.mxu0 %v1496
      %v1498 = vpop.f32.mrf.mxu0
      %v1499 = vadd.f32 %v1464, %v1498
      %v1500 = vand.u32 %v992, 4294901760
      %1501 = vmatmul.f32.gmra.mxu0 %v1500
      %v1502 = vpop.f32.mrf.mxu0
      %v1503 = vadd.f32 %v1468, %v1502
      %1504 = vdwg.mxu0
      %s1505 = scalar_lea.vmem %s207, 96
      %1506 = vst.msk [vmem:[%s1505] sm:$0xff] %vm599, %v1491
      %1507 = vst.msk [vmem:[%s1505 + $0x8] sm:$0xff] %vm599, %v1495
      %1508 = vst.msk [vmem:[%s1505 + $0x10] sm:$0xff] %vm599, %v1499
      %1509 = vst.msk [vmem:[%s1505 + $0x18] sm:$0xff] %vm599, %v1503
      %s1510 = smul.u32 4, %s19
      %p1511 = scmp.lt.s32.totalorder %s18, 1
      %s1512 = scalar_select %p1511, %s18, 1
      %p1513 = scmp.lt.s32.totalorder %s1510, 3
      %s1514 = scalar_select %p1513, %s1510, 3
      %p1515 = scmp.lt.s32.totalorder %s20, 0
      %s1516 = scalar_select %p1515, %s20, 0
      %s1517 = sadd.s32 %s1516, %s1514
      %s1518 = smul.addr %s1512, 16
      %s1519 = sadd.s32 %s1517, %s1518
      %s1520 = smul.addr %s1519, 8
      %s1521 = scalar_lea.vmem %s2, %s1520
      // Predicated region
      $region29: #{tpu_custom_call.1} parent=27 // pred_check
        %p1522 = pneg %p105
      $region30: #{tpu_custom_call.1} parent=27 // pred_check_branch
        %1524 = sbr.rel (%p1522) target = $region32
      $region31: #{tpu_custom_call.1} parent=27 // pred_region
        %s1525 = smul.u32 4, %s19
      $region32: #{tpu_custom_call.1} parent=27 // pred_fallthru
        _
    $region28: #{tpu_custom_call.1} parent=5 // pred_fallthru
      _
    %p1526 = scmp.le.s32.totalorder 2, %s8
    // Predicated region
    $region33: #{tpu_custom_call.1} parent=5 // pred_check
      %p1527 = pneg %p1526
    $region34: #{tpu_custom_call.1} parent=5 // pred_check_branch
      %1529 = sbr.rel (%p1527) target = $region36
    $region35: #{tpu_custom_call.1} parent=5 // pred_region
      %s1530 = ssub.s32 %s8, 2
      // Predicated region
      $region37: #{tpu_custom_call.1} parent=35 // pred_check
        %p1531 = pneg %p111
      $region38: #{tpu_custom_call.1} parent=35 // pred_check_branch
        %1533 = sbr.rel (%p1531) target = $region40
      $region39: #{tpu_custom_call.1} parent=35 // pred_region
        %s1534 = smul.u32 4, %s22
        %p1535 = scmp.lt.s32.totalorder %s21, 1
        %s1536 = scalar_select %p1535, %s21, 1
        %p1537 = scmp.lt.s32.totalorder %s1534, 3
        %s1538 = scalar_select %p1537, %s1534, 3
        %p1539 = scmp.lt.s32.totalorder %s23, 0
        %s1540 = scalar_select %p1539, %s23, 0
        %s1541 = sadd.s32 %s1540, %s1538
        %s1542 = smul.addr %s1536, 16
        %s1543 = sadd.s32 %s1541, %s1542
        %s1544 = smul.addr %s1543, 8
        %s1545 = scalar_lea.vmem %s2, %s1544
      $region40: #{tpu_custom_call.1} parent=35 // pred_fallthru
        _
    $region36: #{tpu_custom_call.1} parent=5 // pred_fallthru
      _
  $region6: #{tpu_custom_call.1} parent=0 // loop_footer
    %s12 = sadd.s32 1, %s8
  $region7: #{tpu_custom_call.1} parent=0 // loop_footer_branch
    %7 = sbr.rel target = $region3
  $region8: #{tpu_custom_call.1} parent=0 // loop_exit
    _

</llo_original>
